<compile_context>
chip_gen: v6e
topology: v6e:2x2x1
jax: 0.10.0
libtpu: 0.0.40
codegen_flags: <defaults>
</compile_context>

<pallas_src>
import math
from functools import partial

import jax
import jax.numpy as jnp
import numpy as np
from jax.experimental import pallas as pl
from jax.experimental.pallas import tpu as pltpu

_BN_EPS = 1e-5
_LANES = 128


def _round_up(x, m):
    return (x + m - 1) // m * m


def _fold_bn(gamma, beta, mean, var):
    scale = gamma / jnp.sqrt(var + _BN_EPS)
    return scale.astype(jnp.float32), (beta - mean * scale).astype(jnp.float32)


def _fold_branches(params, has_identity):
    """Fold conv3x3+BN, conv1x1+BN and BN(identity) into one 3x3 conv (eval mode)."""
    w3 = params["w3"].astype(jnp.float32)                  # (O, I, 3, 3)
    w1 = params["w1"].astype(jnp.float32)                  # (O, I, 1, 1)
    cout, cin = w3.shape[0], w3.shape[1]

    s3, b3 = _fold_bn(*params["bn3"])
    s1, b1 = _fold_bn(*params["bn1"])

    w_eff = w3 * s3[:, None, None, None]
    w_eff = w_eff.at[:, :, 1, 1].add(w1[:, :, 0, 0] * s1[:, None])
    b_eff = b3 + b1
    if has_identity:                                       # requires cin == cout
        sid, bid = _fold_bn(*params["bnid"])
        w_eff = w_eff.at[:, :, 1, 1].add(
            jnp.eye(cout, cin, dtype=jnp.float32) * sid[:, None])
        b_eff = b_eff + bid
    return w_eff, b_eff


def _repvgg_fused_kernel(x_ref, w_ref, b_ref, o_ref):
    """Fused (pre-folded) 3x3 conv + bias + ReLU on one output row tile.

    x_ref : (1, H+2, W+2, Cin_p)   zero-padded NHWC image (resident across row tiles)
    w_ref : (9, Cin_p, Cout_p)     folded 3x3 weights, tap-major, BN-scale folded
    b_ref : (1, Cout_p)            folded bias (all three BN branches), f32
    o_ref : (1, TH, W, Cout_p)     output row tile (lane-dense Cout_p)
    """
    _, th, w, cout = o_ref.shape
    cin = x_ref.shape[-1]
    row0 = pl.multiple_of(pl.program_id(1) * th, th)

    acc = jnp.zeros((th * w, cout), jnp.float32)
    for dy in range(3):
        rows = x_ref[0, pl.ds(row0 + dy, th)]              # (TH, W+2, Cin_p)
        for dx in range(3):
            patch = rows[:, dx:dx + w, :].reshape(th * w, cin)
            acc = acc + jnp.dot(patch, w_ref[dy * 3 + dx],
                                preferred_element_type=jnp.float32)

    out = jnp.maximum(acc + b_ref[...], 0.0)
    o_ref[...] = out.reshape(1, th, w, cout).astype(o_ref.dtype)


@partial(jax.jit,
         static_argnames=("has_identity", "stride", "block_rows", "compute_dtype"))
def repvgg_block(x_nchw, params, *, has_identity, stride=1, block_rows=8,
                 compute_dtype=None):
    """RepVGGBlock forward (BN running-stats / eval semantics). NCHW in, NCHW out."""
    if stride != 1:
        raise NotImplementedError("TODO(synk): stride > 1 not implemented")

    n, cin, h, w = x_nchw.shape
    cout = params["w3"].shape[0]
    if has_identity and cin != cout:
        raise ValueError("identity branch requires in_channels == out_channels")

    cdt = jnp.dtype(compute_dtype) if compute_dtype is not None else jnp.dtype(x_nchw.dtype)
    out_dtype = x_nchw.dtype

    cin_p = _round_up(cin, _LANES)
    cout_p = _round_up(cout, _LANES)
    th = math.gcd(h, block_rows)                           # row-tile height (divides H)
    n_row_tiles = h // th
    hp, wp = h + 2, w + 2

    # ---- weight / bias prep: exact branch + BN-scale folding in f32, then cast.
    w_eff, b_eff = _fold_branches(params, has_identity)    # (O,I,3,3), (O,)
    w_k = jnp.transpose(w_eff, (2, 3, 1, 0)).reshape(9, cin, cout)
    w_k = jnp.pad(w_k, ((0, 0), (0, cin_p - cin), (0, cout_p - cout))).astype(cdt)
    b_k = jnp.pad(b_eff, (0, cout_p - cout)).reshape(1, cout_p).astype(jnp.float32)

    # ---- input prep: NCHW->NHWC, 1-px spatial zero pad, lane pad, cast.
    # (single fused XLA pass under jit)
    x = jnp.transpose(x_nchw, (0, 2, 3, 1))
    x = jnp.pad(x, ((0, 0), (1, 1), (1, 1), (0, cin_p - cin))).astype(cdt)

    # ---- VMEM budget (v7x-safe) and cost hints.
    in_item = cdt.itemsize
    out_item = jnp.dtype(out_dtype).itemsize
    x_blk = hp * wp * cin_p * in_item
    o_blk = th * w * cout_p * out_item
    w_bytes = 9 * cin_p * cout_p * in_item
    acc_bytes = th * w * cout_p * 4
    vmem_limit = int(min(2 * (x_blk + o_blk) + w_bytes + cout_p * 4 + acc_bytes
                         + (4 << 20), 64 << 20))
    cost = pl.CostEstimate(
        flops=2 * n * h * w * 9 * cin_p * cout_p,
        transcendentals=0,
        bytes_accessed=n * x_blk + w_bytes + n * h * w * cout_p * out_item)

    out_p = pl.pallas_call(
        _repvgg_fused_kernel,
        out_shape=jax.ShapeDtypeStruct((n, h, w, cout_p), out_dtype),
        grid=(n, n_row_tiles),
        in_specs=[
            pl.BlockSpec((1, hp, wp, cin_p), lambda i, r: (i, 0, 0, 0)),
            pl.BlockSpec((9, cin_p, cout_p), lambda i, r: (0, 0, 0)),
            pl.BlockSpec((1, cout_p), lambda i, r: (0, 0)),
        ],
        out_specs=pl.BlockSpec((1, th, w, cout_p), lambda i, r: (i, r, 0, 0)),
        compiler_params=pltpu.CompilerParams(
            dimension_semantics=("parallel", "arbitrary"),
            vmem_limit_bytes=vmem_limit),
        cost_estimate=cost,
    )(x, w_k, b_k)

    out = out_p[:, :, :, :cout]                            # drop lane padding
    return jnp.transpose(out, (0, 3, 1, 2))                # NHWC -> NCHW


def repvgg_reference(x, params, *, has_identity):
    """Plain-JAX reference (NCHW), mirrors the PyTorch forward in eval mode."""
    dn = ("NCHW", "OIHW", "NCHW")
    y3 = jax.lax.conv_general_dilated(x, params["w3"], (1, 1), ((1, 1), (1, 1)),
                                      dimension_numbers=dn)
    y1 = jax.lax.conv_general_dilated(x, params["w1"], (1, 1), ((0, 0), (0, 0)),
                                      dimension_numbers=dn)

    def bn(y, g, b, m, v):
        g, b, m, v = (t[None, :, None, None] for t in (g, b, m, v))
        return (y - m) / jnp.sqrt(v + _BN_EPS) * g + b

    out = bn(y3, *params["bn3"]) + bn(y1, *params["bn1"])
    if has_identity:
        out = out + bn(x, *params["bnid"])
    return jnp.maximum(out, 0.0)


def make_params(key, in_channels, out_channels, has_identity):
    ks = jax.random.split(key, 6)

    def bn_params(k):
        k1, k2, k3, k4 = jax.random.split(k, 4)
        g = 1.0 + 0.1 * jax.random.normal(k1, (out_channels,), jnp.float32)
        b = 0.1 * jax.random.normal(k2, (out_channels,), jnp.float32)
        m = 0.1 * jax.random.normal(k3, (out_channels,), jnp.float32)
        v = jnp.abs(jax.random.normal(k4, (out_channels,), jnp.float32)) + 0.5
        return (g, b, m, v)

    params = {
        "w3": 0.1 * jax.random.normal(ks[0], (out_channels, in_channels, 3, 3), jnp.float32),
        "w1": 0.1 * jax.random.normal(ks[1], (out_channels, in_channels, 1, 1), jnp.float32),
        "bn3": bn_params(ks[2]),
        "bn1": bn_params(ks[3]),
    }
    if has_identity:
        params["bnid"] = bn_params(ks[4])
    return params


if __name__ == "__main__":
    key = jax.random.PRNGKey(0)
    k_x, k_p = jax.random.split(key)

    N, C, H, W = 2, 4, 16, 16          # in_channels == out_channels, stride == 1
    has_identity = True                # -> bn_identity branch is present

    x = jax.random.normal(k_x, (N, C, H, W), jnp.float32)
    params = make_params(k_p, C, C, has_identity)

    ref = jax.block_until_ready(repvgg_reference(x, params, has_identity=has_identity))

    # f32 compute path (v5e-friendly): exact up to fold/accumulation rounding.
    out_f32 = jax.block_until_ready(
        repvgg_block(x, params, has_identity=has_identity))
    np.testing.assert_allclose(np.asarray(out_f32), np.asarray(ref), rtol=1e-4, atol=1e-4)

    # bf16 operands + f32 accumulation (v6e/v7x MXU fast path).
    out_bf16 = jax.block_until_ready(
        repvgg_block(x, params, has_identity=has_identity, compute_dtype="bfloat16"))
    np.testing.assert_allclose(np.asarray(out_bf16), np.asarray(ref), rtol=1e-1, atol=1e-1)

    print("KERNEL_OK")
</pallas_src>

<mosaic_0001>
module attributes {stable_mosaic.version = 11 : i64} {
  func.func @_repvgg_fused_kernel(%arg0: i32, %arg1: i32, %arg2: memref<1x18x18x128xf32, #tpu.memory_space<vmem>>, %arg3: memref<9x128x128xf32, #tpu.memory_space<vmem>>, %arg4: memref<1x128xf32, #tpu.memory_space<vmem>>, %arg5: memref<1x8x16x128xf32, #tpu.memory_space<vmem>>) attributes {dimension_semantics = [#tpu.dimension_semantics<parallel>, #tpu.dimension_semantics<arbitrary>], iteration_bounds = array<i64: 2, 2>, scalar_prefetch = 0 : i64, scratch_operands = 0 : i64, tpu.core_type = #tpu.core_type<tc>, window_params = [{transform_indices = @transform_0, window_bounds = array<i64: 1, 18, 18, 128>}, {pipeline_mode = #tpu.pipeline_mode<synchronous>, transform_indices = @transform_1, window_bounds = array<i64: 9, 128, 128>}, {pipeline_mode = #tpu.pipeline_mode<synchronous>, transform_indices = @transform_2, window_bounds = array<i64: 1, 128>}, {transform_indices = @transform_3, window_bounds = array<i64: 1, 8, 16, 128>}]} {
    %c8_i32 = arith.constant 8 : i32
    %0 = arith.muli %arg1, %c8_i32 : i32
    %1 = tpu.assume_multiple %0, 8 : i32
    %cst = arith.constant 0.000000e+00 : f32
    %2 = vector.broadcast %cst : f32 to vector<128x128xf32>
    %c0_i32 = arith.constant 0 : i32
    %3 = arith.addi %1, %c0_i32 : i32
    %c0 = arith.constant 0 : index
    %4 = arith.index_cast %3 : i32 to index
    %c0_0 = arith.constant 0 : index
    %c0_1 = arith.constant 0 : index
    %5 = vector.load %arg2[%c0, %4, %c0_0, %c0_1] : memref<1x18x18x128xf32, #tpu.memory_space<vmem>>, vector<1x8x18x128xf32>
    %6 = vector.shape_cast %5 : vector<1x8x18x128xf32> to vector<8x18x128xf32>
    %7 = vector.extract_strided_slice %6 {offsets = [0, 0, 0], sizes = [8, 16, 128], strides = [1, 1, 1]} : vector<8x18x128xf32> to vector<8x16x128xf32>
    %8 = vector.shape_cast %7 : vector<8x16x128xf32> to vector<128x128xf32>
    %c0_2 = arith.constant 0 : index
    %c0_3 = arith.constant 0 : index
    %c0_4 = arith.constant 0 : index
    %9 = vector.load %arg3[%c0_2, %c0_3, %c0_4] : memref<9x128x128xf32, #tpu.memory_space<vmem>>, vector<1x128x128xf32>
    %10 = vector.shape_cast %9 : vector<1x128x128xf32> to vector<128x128xf32>
    %cst_5 = arith.constant dense<0.000000e+00> : vector<128x128xf32>
    %11 = tpu.matmul %8, %10, %cst_5 {dimension_numbers = #tpu.dot_dimension_numbers<[1], [0], [0], [1], [0, 0, 1, 1], [], []>} : vector<128x128xf32>, vector<128x128xf32>, vector<128x128xf32> -> vector<128x128xf32>
    %12 = arith.addf %2, %11 : vector<128x128xf32>
    %13 = vector.extract_strided_slice %6 {offsets = [0, 1, 0], sizes = [8, 16, 128], strides = [1, 1, 1]} : vector<8x18x128xf32> to vector<8x16x128xf32>
    %14 = vector.shape_cast %13 : vector<8x16x128xf32> to vector<128x128xf32>
    %c1 = arith.constant 1 : index
    %c0_6 = arith.constant 0 : index
    %c0_7 = arith.constant 0 : index
    %15 = vector.load %arg3[%c1, %c0_6, %c0_7] : memref<9x128x128xf32, #tpu.memory_space<vmem>>, vector<1x128x128xf32>
    %16 = vector.shape_cast %15 : vector<1x128x128xf32> to vector<128x128xf32>
    %cst_8 = arith.constant dense<0.000000e+00> : vector<128x128xf32>
    %17 = tpu.matmul %14, %16, %cst_8 {dimension_numbers = #tpu.dot_dimension_numbers<[1], [0], [0], [1], [0, 0, 1, 1], [], []>} : vector<128x128xf32>, vector<128x128xf32>, vector<128x128xf32> -> vector<128x128xf32>
    %18 = arith.addf %12, %17 : vector<128x128xf32>
    %19 = vector.extract_strided_slice %6 {offsets = [0, 2, 0], sizes = [8, 16, 128], strides = [1, 1, 1]} : vector<8x18x128xf32> to vector<8x16x128xf32>
    %20 = vector.shape_cast %19 : vector<8x16x128xf32> to vector<128x128xf32>
    %c2 = arith.constant 2 : index
    %c0_9 = arith.constant 0 : index
    %c0_10 = arith.constant 0 : index
    %21 = vector.load %arg3[%c2, %c0_9, %c0_10] : memref<9x128x128xf32, #tpu.memory_space<vmem>>, vector<1x128x128xf32>
    %22 = vector.shape_cast %21 : vector<1x128x128xf32> to vector<128x128xf32>
    %cst_11 = arith.constant dense<0.000000e+00> : vector<128x128xf32>
    %23 = tpu.matmul %20, %22, %cst_11 {dimension_numbers = #tpu.dot_dimension_numbers<[1], [0], [0], [1], [0, 0, 1, 1], [], []>} : vector<128x128xf32>, vector<128x128xf32>, vector<128x128xf32> -> vector<128x128xf32>
    %24 = arith.addf %18, %23 : vector<128x128xf32>
    %c1_i32 = arith.constant 1 : i32
    %25 = arith.addi %1, %c1_i32 : i32
    %c0_12 = arith.constant 0 : index
    %26 = arith.index_cast %25 : i32 to index
    %c0_13 = arith.constant 0 : index
    %c0_14 = arith.constant 0 : index
    %27 = vector.load %arg2[%c0_12, %26, %c0_13, %c0_14] : memref<1x18x18x128xf32, #tpu.memory_space<vmem>>, vector<1x8x18x128xf32>
    %28 = vector.shape_cast %27 : vector<1x8x18x128xf32> to vector<8x18x128xf32>
    %29 = vector.extract_strided_slice %28 {offsets = [0, 0, 0], sizes = [8, 16, 128], strides = [1, 1, 1]} : vector<8x18x128xf32> to vector<8x16x128xf32>
    %30 = vector.shape_cast %29 : vector<8x16x128xf32> to vector<128x128xf32>
    %c3 = arith.constant 3 : index
    %c0_15 = arith.constant 0 : index
    %c0_16 = arith.constant 0 : index
    %31 = vector.load %arg3[%c3, %c0_15, %c0_16] : memref<9x128x128xf32, #tpu.memory_space<vmem>>, vector<1x128x128xf32>
    %32 = vector.shape_cast %31 : vector<1x128x128xf32> to vector<128x128xf32>
    %cst_17 = arith.constant dense<0.000000e+00> : vector<128x128xf32>
    %33 = tpu.matmul %30, %32, %cst_17 {dimension_numbers = #tpu.dot_dimension_numbers<[1], [0], [0], [1], [0, 0, 1, 1], [], []>} : vector<128x128xf32>, vector<128x128xf32>, vector<128x128xf32> -> vector<128x128xf32>
    %34 = arith.addf %24, %33 : vector<128x128xf32>
    %35 = vector.extract_strided_slice %28 {offsets = [0, 1, 0], sizes = [8, 16, 128], strides = [1, 1, 1]} : vector<8x18x128xf32> to vector<8x16x128xf32>
    %36 = vector.shape_cast %35 : vector<8x16x128xf32> to vector<128x128xf32>
    %c4 = arith.constant 4 : index
    %c0_18 = arith.constant 0 : index
    %c0_19 = arith.constant 0 : index
    %37 = vector.load %arg3[%c4, %c0_18, %c0_19] : memref<9x128x128xf32, #tpu.memory_space<vmem>>, vector<1x128x128xf32>
    %38 = vector.shape_cast %37 : vector<1x128x128xf32> to vector<128x128xf32>
    %cst_20 = arith.constant dense<0.000000e+00> : vector<128x128xf32>
    %39 = tpu.matmul %36, %38, %cst_20 {dimension_numbers = #tpu.dot_dimension_numbers<[1], [0], [0], [1], [0, 0, 1, 1], [], []>} : vector<128x128xf32>, vector<128x128xf32>, vector<128x128xf32> -> vector<128x128xf32>
    %40 = arith.addf %34, %39 : vector<128x128xf32>
    %41 = vector.extract_strided_slice %28 {offsets = [0, 2, 0], sizes = [8, 16, 128], strides = [1, 1, 1]} : vector<8x18x128xf32> to vector<8x16x128xf32>
    %42 = vector.shape_cast %41 : vector<8x16x128xf32> to vector<128x128xf32>
    %c5 = arith.constant 5 : index
    %c0_21 = arith.constant 0 : index
    %c0_22 = arith.constant 0 : index
    %43 = vector.load %arg3[%c5, %c0_21, %c0_22] : memref<9x128x128xf32, #tpu.memory_space<vmem>>, vector<1x128x128xf32>
    %44 = vector.shape_cast %43 : vector<1x128x128xf32> to vector<128x128xf32>
    %cst_23 = arith.constant dense<0.000000e+00> : vector<128x128xf32>
    %45 = tpu.matmul %42, %44, %cst_23 {dimension_numbers = #tpu.dot_dimension_numbers<[1], [0], [0], [1], [0, 0, 1, 1], [], []>} : vector<128x128xf32>, vector<128x128xf32>, vector<128x128xf32> -> vector<128x128xf32>
    %46 = arith.addf %40, %45 : vector<128x128xf32>
    %c2_i32 = arith.constant 2 : i32
    %47 = arith.addi %1, %c2_i32 : i32
    %c0_24 = arith.constant 0 : index
    %48 = arith.index_cast %47 : i32 to index
    %c0_25 = arith.constant 0 : index
    %c0_26 = arith.constant 0 : index
    %49 = vector.load %arg2[%c0_24, %48, %c0_25, %c0_26] : memref<1x18x18x128xf32, #tpu.memory_space<vmem>>, vector<1x8x18x128xf32>
    %50 = vector.shape_cast %49 : vector<1x8x18x128xf32> to vector<8x18x128xf32>
    %51 = vector.extract_strided_slice %50 {offsets = [0, 0, 0], sizes = [8, 16, 128], strides = [1, 1, 1]} : vector<8x18x128xf32> to vector<8x16x128xf32>
    %52 = vector.shape_cast %51 : vector<8x16x128xf32> to vector<128x128xf32>
    %c6 = arith.constant 6 : index
    %c0_27 = arith.constant 0 : index
    %c0_28 = arith.constant 0 : index
    %53 = vector.load %arg3[%c6, %c0_27, %c0_28] : memref<9x128x128xf32, #tpu.memory_space<vmem>>, vector<1x128x128xf32>
    %54 = vector.shape_cast %53 : vector<1x128x128xf32> to vector<128x128xf32>
    %cst_29 = arith.constant dense<0.000000e+00> : vector<128x128xf32>
    %55 = tpu.matmul %52, %54, %cst_29 {dimension_numbers = #tpu.dot_dimension_numbers<[1], [0], [0], [1], [0, 0, 1, 1], [], []>} : vector<128x128xf32>, vector<128x128xf32>, vector<128x128xf32> -> vector<128x128xf32>
    %56 = arith.addf %46, %55 : vector<128x128xf32>
    %57 = vector.extract_strided_slice %50 {offsets = [0, 1, 0], sizes = [8, 16, 128], strides = [1, 1, 1]} : vector<8x18x128xf32> to vector<8x16x128xf32>
    %58 = vector.shape_cast %57 : vector<8x16x128xf32> to vector<128x128xf32>
    %c7 = arith.constant 7 : index
    %c0_30 = arith.constant 0 : index
    %c0_31 = arith.constant 0 : index
    %59 = vector.load %arg3[%c7, %c0_30, %c0_31] : memref<9x128x128xf32, #tpu.memory_space<vmem>>, vector<1x128x128xf32>
    %60 = vector.shape_cast %59 : vector<1x128x128xf32> to vector<128x128xf32>
    %cst_32 = arith.constant dense<0.000000e+00> : vector<128x128xf32>
    %61 = tpu.matmul %58, %60, %cst_32 {dimension_numbers = #tpu.dot_dimension_numbers<[1], [0], [0], [1], [0, 0, 1, 1], [], []>} : vector<128x128xf32>, vector<128x128xf32>, vector<128x128xf32> -> vector<128x128xf32>
    %62 = arith.addf %56, %61 : vector<128x128xf32>
    %63 = vector.extract_strided_slice %50 {offsets = [0, 2, 0], sizes = [8, 16, 128], strides = [1, 1, 1]} : vector<8x18x128xf32> to vector<8x16x128xf32>
    %64 = vector.shape_cast %63 : vector<8x16x128xf32> to vector<128x128xf32>
    %c8 = arith.constant 8 : index
    %c0_33 = arith.constant 0 : index
    %c0_34 = arith.constant 0 : index
    %65 = vector.load %arg3[%c8, %c0_33, %c0_34] : memref<9x128x128xf32, #tpu.memory_space<vmem>>, vector<1x128x128xf32>
    %66 = vector.shape_cast %65 : vector<1x128x128xf32> to vector<128x128xf32>
    %cst_35 = arith.constant dense<0.000000e+00> : vector<128x128xf32>
    %67 = tpu.matmul %64, %66, %cst_35 {dimension_numbers = #tpu.dot_dimension_numbers<[1], [0], [0], [1], [0, 0, 1, 1], [], []>} : vector<128x128xf32>, vector<128x128xf32>, vector<128x128xf32> -> vector<128x128xf32>
    %68 = arith.addf %62, %67 : vector<128x128xf32>
    %c0_36 = arith.constant 0 : index
    %c0_37 = arith.constant 0 : index
    %69 = vector.load %arg4[%c0_36, %c0_37] : memref<1x128xf32, #tpu.memory_space<vmem>>, vector<1x128xf32>
    %70 = vector.broadcast %69 : vector<1x128xf32> to vector<128x128xf32>
    %71 = arith.addf %68, %70 : vector<128x128xf32>
    %cst_38 = arith.constant 0.000000e+00 : f32
    %72 = vector.broadcast %cst_38 : f32 to vector<128x128xf32>
    %73 = arith.maximumf %71, %72 : vector<128x128xf32>
    %74 = vector.shape_cast %73 : vector<128x128xf32> to vector<1x8x16x128xf32>
    %c0_39 = arith.constant 0 : index
    %c0_40 = arith.constant 0 : index
    %c0_41 = arith.constant 0 : index
    %c0_42 = arith.constant 0 : index
    %75 = vector.load %arg5[%c0_39, %c0_40, %c0_41, %c0_42] : memref<1x8x16x128xf32, #tpu.memory_space<vmem>>, vector<1x8x16x128xf32>
    tpu.vector_store %arg5[%c0_39, %c0_40, %c0_41, %c0_42], %74 {strides = array<i32>} : memref<1x8x16x128xf32, #tpu.memory_space<vmem>>, vector<1x8x16x128xf32>,
    return
  }
  func.func @transform_0(%arg0: i32, %arg1: i32) -> (i32, i32, i32, i32) {
    %c0_i32 = arith.constant 0 : i32
    %c0_i32_0 = arith.constant 0 : i32
    %c0_i32_1 = arith.constant 0 : i32
    %c0_i32_2 = arith.constant 0 : i32
    return %arg0, %c0_i32, %c0_i32_0, %c0_i32_1 : i32, i32, i32, i32
  }
  func.func @transform_1(%arg0: i32, %arg1: i32) -> (i32, i32, i32) {
    %c0_i32 = arith.constant 0 : i32
    %c0_i32_0 = arith.constant 0 : i32
    %c0_i32_1 = arith.constant 0 : i32
    %c0_i32_2 = arith.constant 0 : i32
    return %c0_i32, %c0_i32_0, %c0_i32_1 : i32, i32, i32
  }
  func.func @transform_2(%arg0: i32, %arg1: i32) -> (i32, i32) {
    %c0_i32 = arith.constant 0 : i32
    %c0_i32_0 = arith.constant 0 : i32
    %c0_i32_1 = arith.constant 0 : i32
    return %c0_i32, %c0_i32_0 : i32, i32
  }
  func.func @transform_3(%arg0: i32, %arg1: i32) -> (i32, i32, i32, i32) {
    %c0_i32 = arith.constant 0 : i32
    %c0_i32_0 = arith.constant 0 : i32
    %c0_i32_1 = arith.constant 0 : i32
    return %arg0, %arg1, %c0_i32, %c0_i32_0 : i32, i32, i32, i32
  }
}

</mosaic_0001>

<llo_original>
// kernel: repvgg_block.1
$region0: #{repvgg_block.1}
  #allocation0 [shape = 'u32[]', space=smem, size = 0x4, offset = 0x4, fixed_abs, tag = 'smem constant byte address 0x4 - core index']
  #allocation1 [shape = 'u32[144,128]{1,0:T(1,128)}', space=vmem, size = 0x12000, scoped, tag = 'internal scratch']
  %s0 = inlined_call_operand.vmem [shape: f32[2,18,18,128], index: 0, kind: input, shape index: {}]
  %s1 = inlined_call_operand.vmem [shape: f32[9,128,128], index: 1, kind: input, shape index: {}]
  %s2 = inlined_call_operand.vmem [shape: f32[1,128], index: 2, kind: input, shape index: {}]
  %s3 = inlined_call_operand.vmem [shape: f32[2,16,16,128], index: 3, kind: output, shape index: {}]
  %s4 = sld [smem:[#allocation0]]
  $region45: #{repvgg_block.1} parent=0
    _
  %s6 = ssub.s32 1, %s4
  %s7 = scalar_select 0, %s6, %s4
  loop: start=0, step=1, limit=6
  $region2: #{repvgg_block.1} parent=0 // loop_pre_header
    _
  $region3: #{repvgg_block.1} parent=0 // loop_header
    %s9 = sphi 0, %s13
    %p10 = scmp.ge.s32.totalorder %s9, 6
    %s16 = sphi 0, %s28
    %s17 = sphi 0, %s24
    %s18 = sphi 0, %s16
    %s19 = sphi 0, %s17
    %s20 = sphi 0, %s18
    %s21 = sphi 0, %s19
    %s31 = sphi 0, %s33
    %s34 = sphi 0, %s31
    %s35 = sphi 0, %s34
    %s51 = sphi 0, %s35
    %s55 = sphi 0, %s55
    %s57 = sphi 0, %s55
    %s58 = sphi 0, %s57
    %s72 = sphi 0, %s58
    %s76 = sphi 0, %s76
    %s78 = sphi 0, %s76
    %s79 = sphi 0, %s78
    %s93 = sphi 0, %s79
    %s101 = sphi 0, %s103
    %s104 = sphi 0, %s101
    %s105 = sphi 0, %s104
    %s121 = sphi 0, %s105
  $region4: #{repvgg_block.1} parent=0 // loop_header_branch
    %12 = sbr.rel (%p10) target = $region8
  $region5: #{repvgg_block.1} parent=0 // loop_body
    %s14 = ssub.s32 %s9, 1
    %s15 = ssub.s32 %s9, 2
    %s22 = sadd.s32 1, %s17
    %p23 = scmp.ge.s32.totalorder %s22, 2
    %s24 = scalar_select %p23, 0, %s22
    %s25 = sadd.s32 1, %s16
    %s26 = scalar_select %p23, %s25, %s16
    %p27 = scmp.ge.s32.totalorder %s26, 2
    %s28 = scalar_select %p27, 0, %s26
    %s29 = ssub.s32 %s16, %s28
    %p30 = scmp.eq.s32.totalorder %s29, 0
    %s32 = sadd.s32 %s31, 1
    %s33 = scalar_select %p30, %s31, %s32
    %p36 = pneg %p30
    %p37 = scmp.eq.s32.totalorder %s9, 3
    %p38 = por %p36, %p37
    %p39 = scmp.ne.s32.totalorder %s31, %s34
    %p40 = scmp.eq.s32.totalorder %s9, 0
    %p41 = por %p39, %p40
    %p42 = scmp.ne.s32.totalorder %s31, %s34
    %p43 = scmp.eq.s32.totalorder %s14, 3
    %p44 = por %p42, %p43
    %p45 = scmp.ne.s32.totalorder %s34, %s35
    %p46 = scmp.eq.s32.totalorder %s14, 0
    %p47 = por %p45, %p46
    %p48 = scmp.ne.s32.totalorder %s34, %s35
    %p49 = scmp.eq.s32.totalorder %s15, 3
    %p50 = por %p48, %p49
    %p52 = scmp.ne.s32.totalorder %s35, %s51
    %p53 = scmp.eq.s32.totalorder %s15, 0
    %p54 = por %p52, %p53
    %s56 = sadd.s32 %s55, 1
    %p59 = scmp.eq.s32.totalorder %s9, 3
    %p60 = scmp.ne.s32.totalorder %s55, %s57
    %p61 = scmp.eq.s32.totalorder %s9, 0
    %p62 = por %p60, %p61
    %p63 = scmp.ne.s32.totalorder %s55, %s57
    %p64 = scmp.eq.s32.totalorder %s14, 3
    %p65 = por %p63, %p64
    %p66 = scmp.ne.s32.totalorder %s57, %s58
    %p67 = scmp.eq.s32.totalorder %s14, 0
    %p68 = por %p66, %p67
    %p69 = scmp.ne.s32.totalorder %s57, %s58
    %p70 = scmp.eq.s32.totalorder %s15, 3
    %p71 = por %p69, %p70
    %p73 = scmp.ne.s32.totalorder %s58, %s72
    %p74 = scmp.eq.s32.totalorder %s15, 0
    %p75 = por %p73, %p74
    %s77 = sadd.s32 %s76, 1
    %p80 = scmp.eq.s32.totalorder %s9, 3
    %p81 = scmp.ne.s32.totalorder %s76, %s78
    %p82 = scmp.eq.s32.totalorder %s9, 0
    %p83 = por %p81, %p82
    %p84 = scmp.ne.s32.totalorder %s76, %s78
    %p85 = scmp.eq.s32.totalorder %s14, 3
    %p86 = por %p84, %p85
    %p87 = scmp.ne.s32.totalorder %s78, %s79
    %p88 = scmp.eq.s32.totalorder %s14, 0
    %p89 = por %p87, %p88
    %p90 = scmp.ne.s32.totalorder %s78, %s79
    %p91 = scmp.eq.s32.totalorder %s15, 3
    %p92 = por %p90, %p91
    %p94 = scmp.ne.s32.totalorder %s79, %s93
    %p95 = scmp.eq.s32.totalorder %s15, 0
    %p96 = por %p94, %p95
    %s97 = ssub.s32 %s16, %s28
    %s98 = ssub.s32 %s17, %s24
    %s99 = sor.u32 %s97, %s98
    %p100 = scmp.eq.s32.totalorder %s99, 0
    %s102 = sadd.s32 %s101, 1
    %s103 = scalar_select %p100, %s101, %s102
    %p106 = pneg %p100
    %p107 = scmp.eq.s32.totalorder %s9, 3
    %p108 = por %p106, %p107
    %p109 = scmp.ne.s32.totalorder %s101, %s104
    %p110 = scmp.eq.s32.totalorder %s9, 0
    %p111 = por %p109, %p110
    %p112 = scmp.ne.s32.totalorder %s101, %s104
    %p113 = scmp.eq.s32.totalorder %s14, 3
    %p114 = por %p112, %p113
    %p115 = scmp.ne.s32.totalorder %s104, %s105
    %p116 = scmp.eq.s32.totalorder %s14, 0
    %p117 = por %p115, %p116
    %p118 = scmp.ne.s32.totalorder %s104, %s105
    %p119 = scmp.eq.s32.totalorder %s15, 3
    %p120 = por %p118, %p119
    %p122 = scmp.ne.s32.totalorder %s105, %s121
    %p123 = scmp.eq.s32.totalorder %s15, 0
    %p124 = por %p122, %p123
    %p125 = scmp.le.s32.totalorder 1, %s9
    %p126 = scmp.lt.s32.totalorder %s9, 5
    %p127 = pnand %p125, %p126
    %p128 = pneg %p127
    // Predicated region
    $region9: #{repvgg_block.1} parent=5 // pred_check
      _
    $region10: #{repvgg_block.1} parent=5 // pred_check_branch
      %130 = sbr.rel (%p127) target = $region12
    $region11: #{repvgg_block.1} parent=5 // pred_region
      %s131 = ssub.s32 %s9, 1
      // Predicated region
      $region13: #{repvgg_block.1} parent=11 // pred_check
        %p132 = pneg %p68
      $region14: #{repvgg_block.1} parent=11 // pred_check_branch
        %134 = sbr.rel (%p132) target = $region16
      $region15: #{repvgg_block.1} parent=11 // pred_region
        _
      $region16: #{repvgg_block.1} parent=11 // pred_fallthru
        _
      // Predicated region
      $region17: #{repvgg_block.1} parent=11 // pred_check
        %p135 = pneg %p89
      $region18: #{repvgg_block.1} parent=11 // pred_check_branch
        %137 = sbr.rel (%p135) target = $region20
      $region19: #{repvgg_block.1} parent=11 // pred_region
        _
      $region20: #{repvgg_block.1} parent=11 // pred_fallthru
        _
    $region12: #{repvgg_block.1} parent=5 // pred_fallthru
      _
    %p138 = scmp.lt.s32.totalorder %s9, 4
    // Predicated region
    $region21: #{repvgg_block.1} parent=5 // pred_check
      %p139 = pneg %p138
    $region22: #{repvgg_block.1} parent=5 // pred_check_branch
      %141 = sbr.rel (%p139) target = $region24
    $region23: #{repvgg_block.1} parent=5 // pred_region
      // Predicated region
      $region25: #{repvgg_block.1} parent=23 // pred_check
        %p142 = pneg %p41
      $region26: #{repvgg_block.1} parent=23 // pred_check_branch
        %144 = sbr.rel (%p142) target = $region28
      $region27: #{repvgg_block.1} parent=23 // pred_region
        %p145 = scmp.lt.s32.totalorder %s16, 1
        %s146 = scalar_select %p145, %s16, 1
        %s147 = smul.addr %s146, 54
        %s148 = smul.addr %s147, 8
        %s149 = scalar_lea.vmem %s0, %s148
      $region28: #{repvgg_block.1} parent=23 // pred_fallthru
        _
    $region24: #{repvgg_block.1} parent=5 // pred_fallthru
      _
    %p150 = scmp.le.s32.totalorder 1, %s9
    %p151 = scmp.lt.s32.totalorder %s9, 5
    %p152 = pnand %p150, %p151
    %p153 = pneg %p152
    // Predicated region
    $region29: #{repvgg_block.1} parent=5 // pred_check
      _
    $region30: #{repvgg_block.1} parent=5 // pred_check_branch
      %155 = sbr.rel (%p152) target = $region32
    $region31: #{repvgg_block.1} parent=5 // pred_region
      %s156 = ssub.s32 %s9, 1
      %p157 = scmp.lt.s32.totalorder %s18, 1
      %s158 = scalar_select %p157, %s18, 1
      %s159 = smul.addr %s158, 54
      %s160 = smul.addr %s159, 8
      %s161 = scalar_lea.vmem %s0, %s160
      %p162 = pneg %p47
      %p163 = pneg %p44
      %p164 = pneg %p68
      %p165 = pneg %p65
      %p166 = pneg %p89
      %p167 = pneg %p86
      %p168 = pneg %p117
      %p169 = pneg %p114
      %s170 = smul.u32 8, %s19
      %p171 = scmp.lt.s32.totalorder %s18, 1
      %s172 = scalar_select %p171, %s18, 1
      %p173 = scmp.lt.s32.totalorder %s170, 15
      %s174 = scalar_select %p173, %s170, 15
      %s175 = smul.addr %s174, 2
      %s176 = smul.addr %s172, 32
      %s177 = sadd.s32 %s175, %s176
      %s178 = smul.addr %s177, 8
      %s179 = scalar_lea.vmem %s3, %s178
      %p180 = scmp.lt.s32.totalorder %s18, 1
      %s181 = scalar_select %p180, %s18, 1
      %s182 = smul.addr %s181, 54
      %s183 = smul.addr %s182, 8
      %s184 = scalar_lea.vmem %s0, %s183
      %s185 = smul.u32 8, %s19
      %p186 = scmp.lt.s32.totalorder %s18, 1
      %s187 = scalar_select %p186, %s18, 1
      %p188 = scmp.lt.s32.totalorder %s185, 15
      %s189 = scalar_select %p188, %s185, 15
      %s190 = smul.addr %s189, 2
      %s191 = smul.addr %s187, 32
      %s192 = sadd.s32 %s190, %s191
      %s193 = smul.addr %s192, 8
      %s194 = scalar_lea.vmem %s3, %s193
      %s195 = smul.u32 8, %s19
      %s196 = smul.u32 %s19, 8
      %s197 = smul.u32 %s196, 24
      %s198 = scalar_lea.vmem %s184, %s197
      %v199 = vld [vmem:[%s198] sm:$0xff]
      %v200 = vld [vmem:[%s198 + $0x8] sm:$0xff]
      %v201 = vld [vmem:[%s198 + $0x10] sm:$0x3]
      %v202 = vld [vmem:[%s198 + $0x18] sm:$0xff]
      %v203 = vld [vmem:[%s198 + $0x20] sm:$0xff]
      %v204 = vld [vmem:[%s198 + $0x28] sm:$0x3]
      %v205 = vld [vmem:[%s198 + $0x30] sm:$0xff]
      %v206 = vld [vmem:[%s198 + $0x38] sm:$0xff]
      %v207 = vld [vmem:[%s198 + $0x40] sm:$0x3]
      %v208 = vld [vmem:[%s198 + $0x48] sm:$0xff]
      %v209 = vld [vmem:[%s198 + $0x50] sm:$0xff]
      %v210 = vld [vmem:[%s198 + $0x58] sm:$0x3]
      %v211 = vld [vmem:[%s198 + $0x60] sm:$0xff]
      %v212 = vld [vmem:[%s198 + $0x68] sm:$0xff]
      %v213 = vld [vmem:[%s198 + $0x70] sm:$0x3]
      %v214 = vld [vmem:[%s198 + $0x78] sm:$0xff]
      %v215 = vld [vmem:[%s198 + $0x80] sm:$0xff]
      %v216 = vld [vmem:[%s198 + $0x88] sm:$0x3]
      %v217 = vld [vmem:[%s198 + $0x90] sm:$0xff]
      %v218 = vld [vmem:[%s198 + $0x98] sm:$0xff]
      %v219 = vld [vmem:[%s198 + $0xa0] sm:$0x3]
      %v220 = vld [vmem:[%s198 + $0xa8] sm:$0xff]
      %v221 = vld [vmem:[%s198 + $0xb0] sm:$0xff]
      %v222 = vld [vmem:[%s198 + $0xb8] sm:$0x3]
      %v223 = vld [vmem:[%s1] sm:$0xff]
      %v224 = vld [vmem:[%s1 + $0x8] sm:$0xff]
      %v225 = vld [vmem:[%s1 + $0x10] sm:$0xff]
      %v226 = vld [vmem:[%s1 + $0x18] sm:$0xff]
      %v227 = vld [vmem:[%s1 + $0x20] sm:$0xff]
      %v228 = vld [vmem:[%s1 + $0x28] sm:$0xff]
      %v229 = vld [vmem:[%s1 + $0x30] sm:$0xff]
      %v230 = vld [vmem:[%s1 + $0x38] sm:$0xff]
      %v231 = vld [vmem:[%s1 + $0x40] sm:$0xff]
      %v232 = vld [vmem:[%s1 + $0x48] sm:$0xff]
      %v233 = vld [vmem:[%s1 + $0x50] sm:$0xff]
      %v234 = vld [vmem:[%s1 + $0x58] sm:$0xff]
      %v235 = vld [vmem:[%s1 + $0x60] sm:$0xff]
      %v236 = vld [vmem:[%s1 + $0x68] sm:$0xff]
      %v237 = vld [vmem:[%s1 + $0x70] sm:$0xff]
      %v238 = vld [vmem:[%s1 + $0x78] sm:$0xff]
      %vm263 = vcmask 1046528
      %v264 = vrot.slane %v199, 1
      %v265 = vrot.slane %v200, 1
      %v266 = vsel %vm263, %v264, %v265
      %v267 = vrot.slane %v201, 1
      %v268 = vsel %vm263, %v265, %v267
      %v269 = vrot.slane %v202, 1
      %v270 = vrot.slane %v203, 1
      %v271 = vsel %vm263, %v269, %v270
      %v272 = vrot.slane %v204, 1
      %v273 = vsel %vm263, %v270, %v272
      %v274 = vrot.slane %v205, 1
      %v275 = vrot.slane %v206, 1
      %v276 = vsel %vm263, %v274, %v275
      %v277 = vrot.slane %v207, 1
      %v278 = vsel %vm263, %v275, %v277
      %v279 = vrot.slane %v208, 1
      %v280 = vrot.slane %v209, 1
      %v281 = vsel %vm263, %v279, %v280
      %v282 = vrot.slane %v210, 1
      %v283 = vsel %vm263, %v280, %v282
      %v284 = vrot.slane %v211, 1
      %v285 = vrot.slane %v212, 1
      %v286 = vsel %vm263, %v284, %v285
      %v287 = vrot.slane %v213, 1
      %v288 = vsel %vm263, %v285, %v287
      %v289 = vrot.slane %v214, 1
      %v290 = vrot.slane %v215, 1
      %v291 = vsel %vm263, %v289, %v290
      %v292 = vrot.slane %v216, 1
      %v293 = vsel %vm263, %v290, %v292
      %v294 = vrot.slane %v217, 1
      %v295 = vrot.slane %v218, 1
      %v296 = vsel %vm263, %v294, %v295
      %v297 = vrot.slane %v219, 1
      %v298 = vsel %vm263, %v295, %v297
      %v299 = vrot.slane %v220, 1
      %v300 = vrot.slane %v221, 1
      %v301 = vsel %vm263, %v299, %v300
      %v302 = vrot.slane %v222, 1
      %v303 = vsel %vm263, %v300, %v302
      %s320 = scalar_lea.vmem %s1, 128
      %v321 = vld [vmem:[%s320] sm:$0xff]
      %v322 = vld [vmem:[%s320 + $0x8] sm:$0xff]
      %v323 = vld [vmem:[%s320 + $0x10] sm:$0xff]
      %v324 = vld [vmem:[%s320 + $0x18] sm:$0xff]
      %v325 = vld [vmem:[%s320 + $0x20] sm:$0xff]
      %v326 = vld [vmem:[%s320 + $0x28] sm:$0xff]
      %v327 = vld [vmem:[%s320 + $0x30] sm:$0xff]
      %v328 = vld [vmem:[%s320 + $0x38] sm:$0xff]
      %v329 = vld [vmem:[%s320 + $0x40] sm:$0xff]
      %v330 = vld [vmem:[%s320 + $0x48] sm:$0xff]
      %v331 = vld [vmem:[%s320 + $0x50] sm:$0xff]
      %v332 = vld [vmem:[%s320 + $0x58] sm:$0xff]
      %v333 = vld [vmem:[%s320 + $0x60] sm:$0xff]
      %v334 = vld [vmem:[%s320 + $0x68] sm:$0xff]
      %v335 = vld [vmem:[%s320 + $0x70] sm:$0xff]
      %v336 = vld [vmem:[%s320 + $0x78] sm:$0xff]
      %337 = vmatprep.subr.mxu0 0.0
      %338 = vmatpush1.msra.mxu0 %v336
      %339 = vmatprep.subr.mxu0 0.0
      %340 = vmatpush1.msra.mxu0 %v335
      %341 = vmatprep.subr.mxu0 0.0
      %342 = vmatpush1.msra.mxu0 %v334
      %343 = vmatprep.subr.mxu0 0.0
      %344 = vmatpush1.msra.mxu0 %v333
      %345 = vmatprep.subr.mxu0 0.0
      %346 = vmatpush1.msra.mxu0 %v332
      %347 = vmatprep.subr.mxu0 0.0
      %348 = vmatpush1.msra.mxu0 %v331
      %349 = vmatprep.subr.mxu0 0.0
      %350 = vmatpush1.msra.mxu0 %v330
      %351 = vmatprep.subr.mxu0 0.0
      %352 = vmatpush1.msra.mxu0 %v329
      %353 = vmatprep.subr.mxu0 0.0
      %354 = vmatpush1.msra.mxu0 %v328
      %355 = vmatprep.subr.mxu0 0.0
      %356 = vmatpush1.msra.mxu0 %v327
      %357 = vmatprep.subr.mxu0 0.0
      %358 = vmatpush1.msra.mxu0 %v326
      %359 = vmatprep.subr.mxu0 0.0
      %360 = vmatpush1.msra.mxu0 %v325
      %361 = vmatprep.subr.mxu0 0.0
      %362 = vmatpush1.msra.mxu0 %v324
      %363 = vmatprep.subr.mxu0 0.0
      %364 = vmatpush1.msra.mxu0 %v323
      %365 = vmatprep.subr.mxu0 0.0
      %366 = vmatpush1.msra.mxu0 %v322
      %367 = vmatprep.subr.mxu0 0.0
      %368 = vmatpush1.msra.mxu0 %v321
      %369 = vmatprep.subr.mxu0 0.0
      %370 = vmatpush2.msra.mxu0 0.0
      %371 = vmatprep.subr.mxu0 0.0
      %372 = vmatpush2.msra.mxu0 0.0
      %373 = vmatprep.subr.mxu0 0.0
      %374 = vmatpush2.msra.mxu0 0.0
      %375 = vmatprep.subr.mxu0 0.0
      %376 = vmatpush2.msra.mxu0 0.0
      %377 = vmatprep.subr.mxu0 0.0
      %378 = vmatpush2.msra.mxu0 0.0
      %379 = vmatprep.subr.mxu0 0.0
      %380 = vmatpush2.msra.mxu0 0.0
      %381 = vmatprep.subr.mxu0 0.0
      %382 = vmatpush2.msra.mxu0 0.0
      %383 = vmatprep.subr.mxu0 0.0
      %384 = vmatpush2.msra.mxu0 0.0
      %385 = vmatprep.subr.mxu0 0.0
      %386 = vmatpush2.msra.mxu0 0.0
      %387 = vmatprep.subr.mxu0 0.0
      %388 = vmatpush2.msra.mxu0 0.0
      %389 = vmatprep.subr.mxu0 0.0
      %390 = vmatpush2.msra.mxu0 0.0
      %391 = vmatprep.subr.mxu0 0.0
      %392 = vmatpush2.msra.mxu0 0.0
      %393 = vmatprep.subr.mxu0 0.0
      %394 = vmatpush2.msra.mxu0 0.0
      %395 = vmatprep.subr.mxu0 0.0
      %396 = vmatpush2.msra.mxu0 0.0
      %397 = vmatprep.subr.mxu0 0.0
      %398 = vmatpush2.msra.mxu0 0.0
      %399 = vmatprep.subr.mxu0 0.0
      %400 = vmatpush2.msra.mxu0 0.0
      %401 = vmatprep.mubr.f32.mxu0 0.0
      %402 = vmatmul.mubr.f32.gmra.mxu0 %v266
      %v403 = vpop.f32.mrf.mxu0
      %v404 = vadd.f32 0.0, %v403
      %v405 = vpop.f32.mrf.mxu0
      %406 = vmatprep.mubr.f32.mxu0 0.0
      %407 = vmatmul.mubr.f32.gmra.mxu0 %v268
      %v408 = vpop.f32.mrf.mxu0
      %v409 = vadd.f32 0.0, %v408
      %v410 = vpop.f32.mrf.mxu0
      %411 = vmatprep.mubr.f32.mxu0 0.0
      %412 = vmatmul.mubr.f32.gmra.mxu0 %v271
      %v413 = vpop.f32.mrf.mxu0
      %v414 = vadd.f32 0.0, %v413
      %v415 = vpop.f32.mrf.mxu0
      %416 = vmatprep.mubr.f32.mxu0 0.0
      %417 = vmatmul.mubr.f32.gmra.mxu0 %v273
      %v418 = vpop.f32.mrf.mxu0
      %v419 = vadd.f32 0.0, %v418
      %v420 = vpop.f32.mrf.mxu0
      %421 = vmatprep.mubr.f32.mxu0 0.0
      %422 = vmatmul.mubr.f32.gmra.mxu0 %v276
      %v423 = vpop.f32.mrf.mxu0
      %v424 = vadd.f32 0.0, %v423
      %v425 = vpop.f32.mrf.mxu0
      %426 = vmatprep.mubr.f32.mxu0 0.0
      %427 = vmatmul.mubr.f32.gmra.mxu0 %v278
      %v428 = vpop.f32.mrf.mxu0
      %v429 = vadd.f32 0.0, %v428
      %v430 = vpop.f32.mrf.mxu0
      %431 = vmatprep.mubr.f32.mxu0 0.0
      %432 = vmatmul.mubr.f32.gmra.mxu0 %v281
      %v433 = vpop.f32.mrf.mxu0
      %v434 = vadd.f32 0.0, %v433
      %v435 = vpop.f32.mrf.mxu0
      %436 = vmatprep.mubr.f32.mxu0 0.0
      %437 = vmatmul.mubr.f32.gmra.mxu0 %v283
      %v438 = vpop.f32.mrf.mxu0
      %v439 = vadd.f32 0.0, %v438
      %v440 = vpop.f32.mrf.mxu0
      %441 = vmatprep.mubr.f32.mxu0 0.0
      %442 = vmatmul.mubr.f32.gmra.mxu0 %v286
      %v443 = vpop.f32.mrf.mxu0
      %v444 = vadd.f32 0.0, %v443
      %v445 = vpop.f32.mrf.mxu0
      %446 = vmatprep.mubr.f32.mxu0 0.0
      %447 = vmatmul.mubr.f32.gmra.mxu0 %v288
      %v448 = vpop.f32.mrf.mxu0
      %v449 = vadd.f32 0.0, %v448
      %v450 = vpop.f32.mrf.mxu0
      %451 = vmatprep.mubr.f32.mxu0 0.0
      %452 = vmatmul.mubr.f32.gmra.mxu0 %v291
      %v453 = vpop.f32.mrf.mxu0
      %v454 = vadd.f32 0.0, %v453
      %v455 = vpop.f32.mrf.mxu0
      %456 = vmatprep.mubr.f32.mxu0 0.0
      %457 = vmatmul.mubr.f32.gmra.mxu0 %v293
      %v458 = vpop.f32.mrf.mxu0
      %v459 = vadd.f32 0.0, %v458
      %v460 = vpop.f32.mrf.mxu0
      %461 = vmatprep.mubr.f32.mxu0 0.0
      %462 = vmatmul.mubr.f32.gmra.mxu0 %v296
      %v463 = vpop.f32.mrf.mxu0
      %v464 = vadd.f32 0.0, %v463
      %v465 = vpop.f32.mrf.mxu0
      %466 = vmatprep.mubr.f32.mxu0 0.0
      %467 = vmatmul.mubr.f32.gmra.mxu0 %v298
      %v468 = vpop.f32.mrf.mxu0
      %v469 = vadd.f32 0.0, %v468
      %v470 = vpop.f32.mrf.mxu0
      %471 = vmatprep.mubr.f32.mxu0 0.0
      %472 = vmatmul.mubr.f32.gmra.mxu0 %v301
      %v473 = vpop.f32.mrf.mxu0
      %v474 = vadd.f32 0.0, %v473
      %v475 = vpop.f32.mrf.mxu0
      %476 = vmatprep.mubr.f32.mxu0 0.0
      %477 = vmatmul.mubr.f32.gmra.mxu0 %v303
      %v478 = vpop.f32.mrf.mxu0
      %v479 = vadd.f32 0.0, %v478
      %v480 = vpop.f32.mrf.mxu0
      %481 = vdwg.mxu0
      %482 = vmatprep.subr.mxu0 0.0
      %483 = vmatpush1.msra.mxu0 %v238
      %484 = vmatprep.subr.mxu0 0.0
      %485 = vmatpush1.msra.mxu0 %v237
      %486 = vmatprep.subr.mxu0 0.0
      %487 = vmatpush1.msra.mxu0 %v236
      %488 = vmatprep.subr.mxu0 0.0
      %489 = vmatpush1.msra.mxu0 %v235
      %490 = vmatprep.subr.mxu0 0.0
      %491 = vmatpush1.msra.mxu0 %v234
      %492 = vmatprep.subr.mxu0 0.0
      %493 = vmatpush1.msra.mxu0 %v233
      %494 = vmatprep.subr.mxu0 0.0
      %495 = vmatpush1.msra.mxu0 %v232
      %496 = vmatprep.subr.mxu0 0.0
      %497 = vmatpush1.msra.mxu0 %v231
      %498 = vmatprep.subr.mxu0 0.0
      %499 = vmatpush1.msra.mxu0 %v230
      %500 = vmatprep.subr.mxu0 0.0
      %501 = vmatpush1.msra.mxu0 %v229
      %502 = vmatprep.subr.mxu0 0.0
      %503 = vmatpush1.msra.mxu0 %v228
      %504 = vmatprep.subr.mxu0 0.0
      %505 = vmatpush1.msra.mxu0 %v227
      %506 = vmatprep.subr.mxu0 0.0
      %507 = vmatpush1.msra.mxu0 %v226
      %508 = vmatprep.subr.mxu0 0.0
      %509 = vmatpush1.msra.mxu0 %v225
      %510 = vmatprep.subr.mxu0 0.0
      %511 = vmatpush1.msra.mxu0 %v224
      %512 = vmatprep.subr.mxu0 0.0
      %513 = vmatpush1.msra.mxu0 %v223
      %514 = vmatprep.subr.mxu0 0.0
      %515 = vmatpush2.msra.mxu0 0.0
      %516 = vmatprep.subr.mxu0 0.0
      %517 = vmatpush2.msra.mxu0 0.0
      %518 = vmatprep.subr.mxu0 0.0
      %519 = vmatpush2.msra.mxu0 0.0
      %520 = vmatprep.subr.mxu0 0.0
      %521 = vmatpush2.msra.mxu0 0.0
      %522 = vmatprep.subr.mxu0 0.0
      %523 = vmatpush2.msra.mxu0 0.0
      %524 = vmatprep.subr.mxu0 0.0
      %525 = vmatpush2.msra.mxu0 0.0
      %526 = vmatprep.subr.mxu0 0.0
      %527 = vmatpush2.msra.mxu0 0.0
      %528 = vmatprep.subr.mxu0 0.0
      %529 = vmatpush2.msra.mxu0 0.0
      %530 = vmatprep.subr.mxu0 0.0
      %531 = vmatpush2.msra.mxu0 0.0
      %532 = vmatprep.subr.mxu0 0.0
      %533 = vmatpush2.msra.mxu0 0.0
      %534 = vmatprep.subr.mxu0 0.0
      %535 = vmatpush2.msra.mxu0 0.0
      %536 = vmatprep.subr.mxu0 0.0
      %537 = vmatpush2.msra.mxu0 0.0
      %538 = vmatprep.subr.mxu0 0.0
      %539 = vmatpush2.msra.mxu0 0.0
      %540 = vmatprep.subr.mxu0 0.0
      %541 = vmatpush2.msra.mxu0 0.0
      %542 = vmatprep.subr.mxu0 0.0
      %543 = vmatpush2.msra.mxu0 0.0
      %544 = vmatprep.subr.mxu0 0.0
      %545 = vmatpush2.msra.mxu0 0.0
      %546 = vmatprep.mubr.f32.mxu0 0.0
      %547 = vmatmul.mubr.f32.gmra.mxu0 %v199
      %v548 = vpop.f32.mrf.mxu0
      %v549 = vadd.f32 %v404, %v548
      %v550 = vpop.f32.mrf.mxu0
      %551 = vmatprep.mubr.f32.mxu0 0.0
      %552 = vmatmul.mubr.f32.gmra.mxu0 %v200
      %v553 = vpop.f32.mrf.mxu0
      %v554 = vadd.f32 %v409, %v553
      %v555 = vpop.f32.mrf.mxu0
      %556 = vmatprep.mubr.f32.mxu0 0.0
      %557 = vmatmul.mubr.f32.gmra.mxu0 %v202
      %v558 = vpop.f32.mrf.mxu0
      %v559 = vadd.f32 %v414, %v558
      %v560 = vpop.f32.mrf.mxu0
      %561 = vmatprep.mubr.f32.mxu0 0.0
      %562 = vmatmul.mubr.f32.gmra.mxu0 %v203
      %v563 = vpop.f32.mrf.mxu0
      %v564 = vadd.f32 %v419, %v563
      %v565 = vpop.f32.mrf.mxu0
      %566 = vmatprep.mubr.f32.mxu0 0.0
      %567 = vmatmul.mubr.f32.gmra.mxu0 %v205
      %v568 = vpop.f32.mrf.mxu0
      %v569 = vadd.f32 %v424, %v568
      %v570 = vpop.f32.mrf.mxu0
      %571 = vmatprep.mubr.f32.mxu0 0.0
      %572 = vmatmul.mubr.f32.gmra.mxu0 %v206
      %v573 = vpop.f32.mrf.mxu0
      %v574 = vadd.f32 %v429, %v573
      %v575 = vpop.f32.mrf.mxu0
      %576 = vmatprep.mubr.f32.mxu0 0.0
      %577 = vmatmul.mubr.f32.gmra.mxu0 %v208
      %v578 = vpop.f32.mrf.mxu0
      %v579 = vadd.f32 %v434, %v578
      %v580 = vpop.f32.mrf.mxu0
      %581 = vmatprep.mubr.f32.mxu0 0.0
      %582 = vmatmul.mubr.f32.gmra.mxu0 %v209
      %v583 = vpop.f32.mrf.mxu0
      %v584 = vadd.f32 %v439, %v583
      %v585 = vpop.f32.mrf.mxu0
      %586 = vmatprep.mubr.f32.mxu0 0.0
      %587 = vmatmul.mubr.f32.gmra.mxu0 %v211
      %v588 = vpop.f32.mrf.mxu0
      %v589 = vadd.f32 %v444, %v588
      %v590 = vpop.f32.mrf.mxu0
      %591 = vmatprep.mubr.f32.mxu0 0.0
      %592 = vmatmul.mubr.f32.gmra.mxu0 %v212
      %v593 = vpop.f32.mrf.mxu0
      %v594 = vadd.f32 %v449, %v593
      %v595 = vpop.f32.mrf.mxu0
      %596 = vmatprep.mubr.f32.mxu0 0.0
      %597 = vmatmul.mubr.f32.gmra.mxu0 %v214
      %v598 = vpop.f32.mrf.mxu0
      %v599 = vadd.f32 %v454, %v598
      %v600 = vpop.f32.mrf.mxu0
      %601 = vmatprep.mubr.f32.mxu0 0.0
      %602 = vmatmul.mubr.f32.gmra.mxu0 %v215
      %v603 = vpop.f32.mrf.mxu0
      %v604 = vadd.f32 %v459, %v603
      %v605 = vpop.f32.mrf.mxu0
      %606 = vmatprep.mubr.f32.mxu0 0.0
      %607 = vmatmul.mubr.f32.gmra.mxu0 %v217
      %v608 = vpop.f32.mrf.mxu0
      %v609 = vadd.f32 %v464, %v608
      %v610 = vpop.f32.mrf.mxu0
      %611 = vmatprep.mubr.f32.mxu0 0.0
      %612 = vmatmul.mubr.f32.gmra.mxu0 %v218
      %v613 = vpop.f32.mrf.mxu0
      %v614 = vadd.f32 %v469, %v613
      %v615 = vpop.f32.mrf.mxu0
      %616 = vmatprep.mubr.f32.mxu0 0.0
      %617 = vmatmul.mubr.f32.gmra.mxu0 %v220
      %v618 = vpop.f32.mrf.mxu0
      %v619 = vadd.f32 %v474, %v618
      %v620 = vpop.f32.mrf.mxu0
      %621 = vmatprep.mubr.f32.mxu0 0.0
      %622 = vmatmul.mubr.f32.gmra.mxu0 %v221
      %v623 = vpop.f32.mrf.mxu0
      %v624 = vadd.f32 %v479, %v623
      %v625 = vpop.f32.mrf.mxu0
      %626 = vdwg.mxu0
      %vm627 = vcmask 1045504
      %v628 = vrot.slane %v199, 2
      %v629 = vrot.slane %v200, 2
      %v630 = vsel %vm627, %v628, %v629
      %v631 = vrot.slane %v201, 2
      %v632 = vsel %vm627, %v629, %v631
      %v633 = vrot.slane %v202, 2
      %v634 = vrot.slane %v203, 2
      %v635 = vsel %vm627, %v633, %v634
      %v636 = vrot.slane %v204, 2
      %v637 = vsel %vm627, %v634, %v636
      %v638 = vrot.slane %v205, 2
      %v639 = vrot.slane %v206, 2
      %v640 = vsel %vm627, %v638, %v639
      %v641 = vrot.slane %v207, 2
      %v642 = vsel %vm627, %v639, %v641
      %v643 = vrot.slane %v208, 2
      %v644 = vrot.slane %v209, 2
      %v645 = vsel %vm627, %v643, %v644
      %v646 = vrot.slane %v210, 2
      %v647 = vsel %vm627, %v644, %v646
      %v648 = vrot.slane %v211, 2
      %v649 = vrot.slane %v212, 2
      %v650 = vsel %vm627, %v648, %v649
      %v651 = vrot.slane %v213, 2
      %v652 = vsel %vm627, %v649, %v651
      %v653 = vrot.slane %v214, 2
      %v654 = vrot.slane %v215, 2
      %v655 = vsel %vm627, %v653, %v654
      %v656 = vrot.slane %v216, 2
      %v657 = vsel %vm627, %v654, %v656
      %v658 = vrot.slane %v217, 2
      %v659 = vrot.slane %v218, 2
      %v660 = vsel %vm627, %v658, %v659
      %v661 = vrot.slane %v219, 2
      %v662 = vsel %vm627, %v659, %v661
      %v663 = vrot.slane %v220, 2
      %v664 = vrot.slane %v221, 2
      %v665 = vsel %vm627, %v663, %v664
      %v666 = vrot.slane %v222, 2
      %v667 = vsel %vm627, %v664, %v666
      %s684 = scalar_lea.vmem %s1, 256
      %v685 = vld [vmem:[%s684] sm:$0xff]
      %v686 = vld [vmem:[%s684 + $0x8] sm:$0xff]
      %v687 = vld [vmem:[%s684 + $0x10] sm:$0xff]
      %v688 = vld [vmem:[%s684 + $0x18] sm:$0xff]
      %v689 = vld [vmem:[%s684 + $0x20] sm:$0xff]
      %v690 = vld [vmem:[%s684 + $0x28] sm:$0xff]
      %v691 = vld [vmem:[%s684 + $0x30] sm:$0xff]
      %v692 = vld [vmem:[%s684 + $0x38] sm:$0xff]
      %v693 = vld [vmem:[%s684 + $0x40] sm:$0xff]
      %v694 = vld [vmem:[%s684 + $0x48] sm:$0xff]
      %v695 = vld [vmem:[%s684 + $0x50] sm:$0xff]
      %v696 = vld [vmem:[%s684 + $0x58] sm:$0xff]
      %v697 = vld [vmem:[%s684 + $0x60] sm:$0xff]
      %v698 = vld [vmem:[%s684 + $0x68] sm:$0xff]
      %v699 = vld [vmem:[%s684 + $0x70] sm:$0xff]
      %v700 = vld [vmem:[%s684 + $0x78] sm:$0xff]
      %701 = vmatprep.subr.mxu0 0.0
      %702 = vmatpush1.msra.mxu0 %v700
      %703 = vmatprep.subr.mxu0 0.0
      %704 = vmatpush1.msra.mxu0 %v699
      %705 = vmatprep.subr.mxu0 0.0
      %706 = vmatpush1.msra.mxu0 %v698
      %707 = vmatprep.subr.mxu0 0.0
      %708 = vmatpush1.msra.mxu0 %v697
      %709 = vmatprep.subr.mxu0 0.0
      %710 = vmatpush1.msra.mxu0 %v696
      %711 = vmatprep.subr.mxu0 0.0
      %712 = vmatpush1.msra.mxu0 %v695
      %713 = vmatprep.subr.mxu0 0.0
      %714 = vmatpush1.msra.mxu0 %v694
      %715 = vmatprep.subr.mxu0 0.0
      %716 = vmatpush1.msra.mxu0 %v693
      %717 = vmatprep.subr.mxu0 0.0
      %718 = vmatpush1.msra.mxu0 %v692
      %719 = vmatprep.subr.mxu0 0.0
      %720 = vmatpush1.msra.mxu0 %v691
      %721 = vmatprep.subr.mxu0 0.0
      %722 = vmatpush1.msra.mxu0 %v690
      %723 = vmatprep.subr.mxu0 0.0
      %724 = vmatpush1.msra.mxu0 %v689
      %725 = vmatprep.subr.mxu0 0.0
      %726 = vmatpush1.msra.mxu0 %v688
      %727 = vmatprep.subr.mxu0 0.0
      %728 = vmatpush1.msra.mxu0 %v687
      %729 = vmatprep.subr.mxu0 0.0
      %730 = vmatpush1.msra.mxu0 %v686
      %731 = vmatprep.subr.mxu0 0.0
      %732 = vmatpush1.msra.mxu0 %v685
      %733 = vmatprep.subr.mxu0 0.0
      %734 = vmatpush2.msra.mxu0 0.0
      %735 = vmatprep.subr.mxu0 0.0
      %736 = vmatpush2.msra.mxu0 0.0
      %737 = vmatprep.subr.mxu0 0.0
      %738 = vmatpush2.msra.mxu0 0.0
      %739 = vmatprep.subr.mxu0 0.0
      %740 = vmatpush2.msra.mxu0 0.0
      %741 = vmatprep.subr.mxu0 0.0
      %742 = vmatpush2.msra.mxu0 0.0
      %743 = vmatprep.subr.mxu0 0.0
      %744 = vmatpush2.msra.mxu0 0.0
      %745 = vmatprep.subr.mxu0 0.0
      %746 = vmatpush2.msra.mxu0 0.0
      %747 = vmatprep.subr.mxu0 0.0
      %748 = vmatpush2.msra.mxu0 0.0
      %749 = vmatprep.subr.mxu0 0.0
      %750 = vmatpush2.msra.mxu0 0.0
      %751 = vmatprep.subr.mxu0 0.0
      %752 = vmatpush2.msra.mxu0 0.0
      %753 = vmatprep.subr.mxu0 0.0
      %754 = vmatpush2.msra.mxu0 0.0
      %755 = vmatprep.subr.mxu0 0.0
      %756 = vmatpush2.msra.mxu0 0.0
      %757 = vmatprep.subr.mxu0 0.0
      %758 = vmatpush2.msra.mxu0 0.0
      %759 = vmatprep.subr.mxu0 0.0
      %760 = vmatpush2.msra.mxu0 0.0
      %761 = vmatprep.subr.mxu0 0.0
      %762 = vmatpush2.msra.mxu0 0.0
      %763 = vmatprep.subr.mxu0 0.0
      %764 = vmatpush2.msra.mxu0 0.0
      %765 = vmatprep.mubr.f32.mxu0 0.0
      %766 = vmatmul.mubr.f32.gmra.mxu0 %v630
      %v767 = vpop.f32.mrf.mxu0
      %v768 = vadd.f32 0.0, %v767
      %v769 = vpop.f32.mrf.mxu0
      %770 = vmatprep.mubr.f32.mxu0 0.0
      %771 = vmatmul.mubr.f32.gmra.mxu0 %v632
      %v772 = vpop.f32.mrf.mxu0
      %v773 = vadd.f32 0.0, %v772
      %v774 = vpop.f32.mrf.mxu0
      %775 = vmatprep.mubr.f32.mxu0 0.0
      %776 = vmatmul.mubr.f32.gmra.mxu0 %v635
      %v777 = vpop.f32.mrf.mxu0
      %v778 = vadd.f32 0.0, %v777
      %v779 = vpop.f32.mrf.mxu0
      %780 = vmatprep.mubr.f32.mxu0 0.0
      %781 = vmatmul.mubr.f32.gmra.mxu0 %v637
      %v782 = vpop.f32.mrf.mxu0
      %v783 = vadd.f32 0.0, %v782
      %v784 = vpop.f32.mrf.mxu0
      %785 = vmatprep.mubr.f32.mxu0 0.0
      %786 = vmatmul.mubr.f32.gmra.mxu0 %v640
      %v787 = vpop.f32.mrf.mxu0
      %v788 = vadd.f32 0.0, %v787
      %v789 = vpop.f32.mrf.mxu0
      %790 = vmatprep.mubr.f32.mxu0 0.0
      %791 = vmatmul.mubr.f32.gmra.mxu0 %v642
      %v792 = vpop.f32.mrf.mxu0
      %v793 = vadd.f32 0.0, %v792
      %v794 = vpop.f32.mrf.mxu0
      %795 = vmatprep.mubr.f32.mxu0 0.0
      %796 = vmatmul.mubr.f32.gmra.mxu0 %v645
      %v797 = vpop.f32.mrf.mxu0
      %v798 = vadd.f32 0.0, %v797
      %v799 = vpop.f32.mrf.mxu0
      %800 = vmatprep.mubr.f32.mxu0 0.0
      %801 = vmatmul.mubr.f32.gmra.mxu0 %v647
      %v802 = vpop.f32.mrf.mxu0
      %v803 = vadd.f32 0.0, %v802
      %v804 = vpop.f32.mrf.mxu0
      %805 = vmatprep.mubr.f32.mxu0 0.0
      %806 = vmatmul.mubr.f32.gmra.mxu0 %v650
      %v807 = vpop.f32.mrf.mxu0
      %v808 = vadd.f32 0.0, %v807
      %v809 = vpop.f32.mrf.mxu0
      %810 = vmatprep.mubr.f32.mxu0 0.0
      %811 = vmatmul.mubr.f32.gmra.mxu0 %v652
      %v812 = vpop.f32.mrf.mxu0
      %v813 = vadd.f32 0.0, %v812
      %v814 = vpop.f32.mrf.mxu0
      %815 = vmatprep.mubr.f32.mxu0 0.0
      %816 = vmatmul.mubr.f32.gmra.mxu0 %v655
      %v817 = vpop.f32.mrf.mxu0
      %v818 = vadd.f32 0.0, %v817
      %v819 = vpop.f32.mrf.mxu0
      %820 = vmatprep.mubr.f32.mxu0 0.0
      %821 = vmatmul.mubr.f32.gmra.mxu0 %v657
      %v822 = vpop.f32.mrf.mxu0
      %v823 = vadd.f32 0.0, %v822
      %v824 = vpop.f32.mrf.mxu0
      %825 = vmatprep.mubr.f32.mxu0 0.0
      %826 = vmatmul.mubr.f32.gmra.mxu0 %v660
      %v827 = vpop.f32.mrf.mxu0
      %v828 = vadd.f32 0.0, %v827
      %v829 = vpop.f32.mrf.mxu0
      %830 = vmatprep.mubr.f32.mxu0 0.0
      %831 = vmatmul.mubr.f32.gmra.mxu0 %v662
      %v832 = vpop.f32.mrf.mxu0
      %v833 = vadd.f32 0.0, %v832
      %v834 = vpop.f32.mrf.mxu0
      %835 = vmatprep.mubr.f32.mxu0 0.0
      %836 = vmatmul.mubr.f32.gmra.mxu0 %v665
      %v837 = vpop.f32.mrf.mxu0
      %v838 = vadd.f32 0.0, %v837
      %v839 = vpop.f32.mrf.mxu0
      %840 = vmatprep.mubr.f32.mxu0 0.0
      %841 = vmatmul.mubr.f32.gmra.mxu0 %v667
      %v842 = vpop.f32.mrf.mxu0
      %v843 = vadd.f32 0.0, %v842
      %v844 = vpop.f32.mrf.mxu0
      %845 = vdwg.mxu0
      %v846 = vadd.f32 %v549, %v768
      %v847 = vadd.f32 %v554, %v773
      %v848 = vadd.f32 %v559, %v778
      %v849 = vadd.f32 %v564, %v783
      %v850 = vadd.f32 %v569, %v788
      %v851 = vadd.f32 %v574, %v793
      %v852 = vadd.f32 %v579, %v798
      %v853 = vadd.f32 %v584, %v803
      %v854 = vadd.f32 %v589, %v808
      %v855 = vadd.f32 %v594, %v813
      %v856 = vadd.f32 %v599, %v818
      %v857 = vadd.f32 %v604, %v823
      %v858 = vadd.f32 %v609, %v828
      %v859 = vadd.f32 %v614, %v833
      %v860 = vadd.f32 %v619, %v838
      %v861 = vadd.f32 %v624, %v843
      %s862 = sadd.s32 %s196, 1
      %s863 = smul.u32 %s862, 24
      %s864 = scalar_lea.vmem %s184, %s863
      %v865 = vld [vmem:[%s864] sm:$0xff]
      %v866 = vld [vmem:[%s864 + $0x8] sm:$0xff]
      %v867 = vld [vmem:[%s864 + $0x10] sm:$0x3]
      %v868 = vld [vmem:[%s864 + $0x18] sm:$0xff]
      %v869 = vld [vmem:[%s864 + $0x20] sm:$0xff]
      %v870 = vld [vmem:[%s864 + $0x28] sm:$0x3]
      %v871 = vld [vmem:[%s864 + $0x30] sm:$0xff]
      %v872 = vld [vmem:[%s864 + $0x38] sm:$0xff]
      %v873 = vld [vmem:[%s864 + $0x40] sm:$0x3]
      %v874 = vld [vmem:[%s864 + $0x48] sm:$0xff]
      %v875 = vld [vmem:[%s864 + $0x50] sm:$0xff]
      %v876 = vld [vmem:[%s864 + $0x58] sm:$0x3]
      %v877 = vld [vmem:[%s864 + $0x60] sm:$0xff]
      %v878 = vld [vmem:[%s864 + $0x68] sm:$0xff]
      %v879 = vld [vmem:[%s864 + $0x70] sm:$0x3]
      %v880 = vld [vmem:[%s864 + $0x78] sm:$0xff]
      %v881 = vld [vmem:[%s864 + $0x80] sm:$0xff]
      %v882 = vld [vmem:[%s864 + $0x88] sm:$0x3]
      %v883 = vld [vmem:[%s864 + $0x90] sm:$0xff]
      %v884 = vld [vmem:[%s864 + $0x98] sm:$0xff]
      %v885 = vld [vmem:[%s864 + $0xa0] sm:$0x3]
      %v886 = vld [vmem:[%s864 + $0xa8] sm:$0xff]
      %v887 = vld [vmem:[%s864 + $0xb0] sm:$0xff]
      %v888 = vld [vmem:[%s864 + $0xb8] sm:$0x3]
      %s889 = scalar_lea.vmem %s1, 384
      %v890 = vld [vmem:[%s889] sm:$0xff]
      %v891 = vld [vmem:[%s889 + $0x8] sm:$0xff]
      %v892 = vld [vmem:[%s889 + $0x10] sm:$0xff]
      %v893 = vld [vmem:[%s889 + $0x18] sm:$0xff]
      %v894 = vld [vmem:[%s889 + $0x20] sm:$0xff]
      %v895 = vld [vmem:[%s889 + $0x28] sm:$0xff]
      %v896 = vld [vmem:[%s889 + $0x30] sm:$0xff]
      %v897 = vld [vmem:[%s889 + $0x38] sm:$0xff]
      %v898 = vld [vmem:[%s889 + $0x40] sm:$0xff]
      %v899 = vld [vmem:[%s889 + $0x48] sm:$0xff]
      %v900 = vld [vmem:[%s889 + $0x50] sm:$0xff]
      %v901 = vld [vmem:[%s889 + $0x58] sm:$0xff]
      %v902 = vld [vmem:[%s889 + $0x60] sm:$0xff]
      %v903 = vld [vmem:[%s889 + $0x68] sm:$0xff]
      %v904 = vld [vmem:[%s889 + $0x70] sm:$0xff]
      %v905 = vld [vmem:[%s889 + $0x78] sm:$0xff]
      %906 = vmatprep.subr.mxu0 0.0
      %907 = vmatpush1.msra.mxu0 %v905
      %908 = vmatprep.subr.mxu0 0.0
      %909 = vmatpush1.msra.mxu0 %v904
      %910 = vmatprep.subr.mxu0 0.0
      %911 = vmatpush1.msra.mxu0 %v903
      %912 = vmatprep.subr.mxu0 0.0
      %913 = vmatpush1.msra.mxu0 %v902
      %914 = vmatprep.subr.mxu0 0.0
      %915 = vmatpush1.msra.mxu0 %v901
      %916 = vmatprep.subr.mxu0 0.0
      %917 = vmatpush1.msra.mxu0 %v900
      %918 = vmatprep.subr.mxu0 0.0
      %919 = vmatpush1.msra.mxu0 %v899
      %920 = vmatprep.subr.mxu0 0.0
      %921 = vmatpush1.msra.mxu0 %v898
      %922 = vmatprep.subr.mxu0 0.0
      %923 = vmatpush1.msra.mxu0 %v897
      %924 = vmatprep.subr.mxu0 0.0
      %925 = vmatpush1.msra.mxu0 %v896
      %926 = vmatprep.subr.mxu0 0.0
      %927 = vmatpush1.msra.mxu0 %v895
      %928 = vmatprep.subr.mxu0 0.0
      %929 = vmatpush1.msra.mxu0 %v894
      %930 = vmatprep.subr.mxu0 0.0
      %931 = vmatpush1.msra.mxu0 %v893
      %932 = vmatprep.subr.mxu0 0.0
      %933 = vmatpush1.msra.mxu0 %v892
      %934 = vmatprep.subr.mxu0 0.0
      %935 = vmatpush1.msra.mxu0 %v891
      %936 = vmatprep.subr.mxu0 0.0
      %937 = vmatpush1.msra.mxu0 %v890
      %938 = vmatprep.subr.mxu0 0.0
      %939 = vmatpush2.msra.mxu0 0.0
      %940 = vmatprep.subr.mxu0 0.0
      %941 = vmatpush2.msra.mxu0 0.0
      %942 = vmatprep.subr.mxu0 0.0
      %943 = vmatpush2.msra.mxu0 0.0
      %944 = vmatprep.subr.mxu0 0.0
      %945 = vmatpush2.msra.mxu0 0.0
      %946 = vmatprep.subr.mxu0 0.0
      %947 = vmatpush2.msra.mxu0 0.0
      %948 = vmatprep.subr.mxu0 0.0
      %949 = vmatpush2.msra.mxu0 0.0
      %950 = vmatprep.subr.mxu0 0.0
      %951 = vmatpush2.msra.mxu0 0.0
      %952 = vmatprep.subr.mxu0 0.0
      %953 = vmatpush2.msra.mxu0 0.0
      %954 = vmatprep.subr.mxu0 0.0
      %955 = vmatpush2.msra.mxu0 0.0
      %956 = vmatprep.subr.mxu0 0.0
      %957 = vmatpush2.msra.mxu0 0.0
      %958 = vmatprep.subr.mxu0 0.0
      %959 = vmatpush2.msra.mxu0 0.0
      %960 = vmatprep.subr.mxu0 0.0
      %961 = vmatpush2.msra.mxu0 0.0
      %962 = vmatprep.subr.mxu0 0.0
      %963 = vmatpush2.msra.mxu0 0.0
      %964 = vmatprep.subr.mxu0 0.0
      %965 = vmatpush2.msra.mxu0 0.0
      %966 = vmatprep.subr.mxu0 0.0
      %967 = vmatpush2.msra.mxu0 0.0
      %968 = vmatprep.subr.mxu0 0.0
      %969 = vmatpush2.msra.mxu0 0.0
      %970 = vmatprep.mubr.f32.mxu0 0.0
      %971 = vmatmul.mubr.f32.gmra.mxu0 %v865
      %v972 = vpop.f32.mrf.mxu0
      %v973 = vadd.f32 0.0, %v972
      %v974 = vpop.f32.mrf.mxu0
      %975 = vmatprep.mubr.f32.mxu0 0.0
      %976 = vmatmul.mubr.f32.gmra.mxu0 %v866
      %v977 = vpop.f32.mrf.mxu0
      %v978 = vadd.f32 0.0, %v977
      %v979 = vpop.f32.mrf.mxu0
      %980 = vmatprep.mubr.f32.mxu0 0.0
      %981 = vmatmul.mubr.f32.gmra.mxu0 %v868
      %v982 = vpop.f32.mrf.mxu0
      %v983 = vadd.f32 0.0, %v982
      %v984 = vpop.f32.mrf.mxu0
      %985 = vmatprep.mubr.f32.mxu0 0.0
      %986 = vmatmul.mubr.f32.gmra.mxu0 %v869
      %v987 = vpop.f32.mrf.mxu0
      %v988 = vadd.f32 0.0, %v987
      %v989 = vpop.f32.mrf.mxu0
      %990 = vmatprep.mubr.f32.mxu0 0.0
      %991 = vmatmul.mubr.f32.gmra.mxu0 %v871
      %v992 = vpop.f32.mrf.mxu0
      %v993 = vadd.f32 0.0, %v992
      %v994 = vpop.f32.mrf.mxu0
      %995 = vmatprep.mubr.f32.mxu0 0.0
      %996 = vmatmul.mubr.f32.gmra.mxu0 %v872
      %v997 = vpop.f32.mrf.mxu0
      %v998 = vadd.f32 0.0, %v997
      %v999 = vpop.f32.mrf.mxu0
      %1000 = vmatprep.mubr.f32.mxu0 0.0
      %1001 = vmatmul.mubr.f32.gmra.mxu0 %v874
      %v1002 = vpop.f32.mrf.mxu0
      %v1003 = vadd.f32 0.0, %v1002
      %v1004 = vpop.f32.mrf.mxu0
      %1005 = vmatprep.mubr.f32.mxu0 0.0
      %1006 = vmatmul.mubr.f32.gmra.mxu0 %v875
      %v1007 = vpop.f32.mrf.mxu0
      %v1008 = vadd.f32 0.0, %v1007
      %v1009 = vpop.f32.mrf.mxu0
      %1010 = vmatprep.mubr.f32.mxu0 0.0
      %1011 = vmatmul.mubr.f32.gmra.mxu0 %v877
      %v1012 = vpop.f32.mrf.mxu0
      %v1013 = vadd.f32 0.0, %v1012
      %v1014 = vpop.f32.mrf.mxu0
      %1015 = vmatprep.mubr.f32.mxu0 0.0
      %1016 = vmatmul.mubr.f32.gmra.mxu0 %v878
      %v1017 = vpop.f32.mrf.mxu0
      %v1018 = vadd.f32 0.0, %v1017
      %v1019 = vpop.f32.mrf.mxu0
      %1020 = vmatprep.mubr.f32.mxu0 0.0
      %1021 = vmatmul.mubr.f32.gmra.mxu0 %v880
      %v1022 = vpop.f32.mrf.mxu0
      %v1023 = vadd.f32 0.0, %v1022
      %v1024 = vpop.f32.mrf.mxu0
      %1025 = vmatprep.mubr.f32.mxu0 0.0
      %1026 = vmatmul.mubr.f32.gmra.mxu0 %v881
      %v1027 = vpop.f32.mrf.mxu0
      %v1028 = vadd.f32 0.0, %v1027
      %v1029 = vpop.f32.mrf.mxu0
      %1030 = vmatprep.mubr.f32.mxu0 0.0
      %1031 = vmatmul.mubr.f32.gmra.mxu0 %v883
      %v1032 = vpop.f32.mrf.mxu0
      %v1033 = vadd.f32 0.0, %v1032
      %v1034 = vpop.f32.mrf.mxu0
      %1035 = vmatprep.mubr.f32.mxu0 0.0
      %1036 = vmatmul.mubr.f32.gmra.mxu0 %v884
      %v1037 = vpop.f32.mrf.mxu0
      %v1038 = vadd.f32 0.0, %v1037
      %v1039 = vpop.f32.mrf.mxu0
      %1040 = vmatprep.mubr.f32.mxu0 0.0
      %1041 = vmatmul.mubr.f32.gmra.mxu0 %v886
      %v1042 = vpop.f32.mrf.mxu0
      %v1043 = vadd.f32 0.0, %v1042
      %v1044 = vpop.f32.mrf.mxu0
      %1045 = vmatprep.mubr.f32.mxu0 0.0
      %1046 = vmatmul.mubr.f32.gmra.mxu0 %v887
      %v1047 = vpop.f32.mrf.mxu0
      %v1048 = vadd.f32 0.0, %v1047
      %v1049 = vpop.f32.mrf.mxu0
      %1050 = vdwg.mxu0
      %v1051 = vadd.f32 %v846, %v973
      %v1052 = vadd.f32 %v847, %v978
      %v1053 = vadd.f32 %v848, %v983
      %v1054 = vadd.f32 %v849, %v988
      %v1055 = vadd.f32 %v850, %v993
      %v1056 = vadd.f32 %v851, %v998
      %v1057 = vadd.f32 %v852, %v1003
      %v1058 = vadd.f32 %v853, %v1008
      %v1059 = vadd.f32 %v854, %v1013
      %v1060 = vadd.f32 %v855, %v1018
      %v1061 = vadd.f32 %v856, %v1023
      %v1062 = vadd.f32 %v857, %v1028
      %v1063 = vadd.f32 %v858, %v1033
      %v1064 = vadd.f32 %v859, %v1038
      %v1065 = vadd.f32 %v860, %v1043
      %v1066 = vadd.f32 %v861, %v1048
      %v1091 = vrot.slane %v865, 1
      %v1092 = vrot.slane %v866, 1
      %v1093 = vsel %vm263, %v1091, %v1092
      %v1094 = vrot.slane %v867, 1
      %v1095 = vsel %vm263, %v1092, %v1094
      %v1096 = vrot.slane %v868, 1
      %v1097 = vrot.slane %v869, 1
      %v1098 = vsel %vm263, %v1096, %v1097
      %v1099 = vrot.slane %v870, 1
      %v1100 = vsel %vm263, %v1097, %v1099
      %v1101 = vrot.slane %v871, 1
      %v1102 = vrot.slane %v872, 1
      %v1103 = vsel %vm263, %v1101, %v1102
      %v1104 = vrot.slane %v873, 1
      %v1105 = vsel %vm263, %v1102, %v1104
      %v1106 = vrot.slane %v874, 1
      %v1107 = vrot.slane %v875, 1
      %v1108 = vsel %vm263, %v1106, %v1107
      %v1109 = vrot.slane %v876, 1
      %v1110 = vsel %vm263, %v1107, %v1109
      %v1111 = vrot.slane %v877, 1
      %v1112 = vrot.slane %v878, 1
      %v1113 = vsel %vm263, %v1111, %v1112
      %v1114 = vrot.slane %v879, 1
      %v1115 = vsel %vm263, %v1112, %v1114
      %v1116 = vrot.slane %v880, 1
      %v1117 = vrot.slane %v881, 1
      %v1118 = vsel %vm263, %v1116, %v1117
      %v1119 = vrot.slane %v882, 1
      %v1120 = vsel %vm263, %v1117, %v1119
      %v1121 = vrot.slane %v883, 1
      %v1122 = vrot.slane %v884, 1
      %v1123 = vsel %vm263, %v1121, %v1122
      %v1124 = vrot.slane %v885, 1
      %v1125 = vsel %vm263, %v1122, %v1124
      %v1126 = vrot.slane %v886, 1
      %v1127 = vrot.slane %v887, 1
      %v1128 = vsel %vm263, %v1126, %v1127
      %v1129 = vrot.slane %v888, 1
      %v1130 = vsel %vm263, %v1127, %v1129
      %s1147 = scalar_lea.vmem %s1, 512
      %v1148 = vld [vmem:[%s1147] sm:$0xff]
      %v1149 = vld [vmem:[%s1147 + $0x8] sm:$0xff]
      %v1150 = vld [vmem:[%s1147 + $0x10] sm:$0xff]
      %v1151 = vld [vmem:[%s1147 + $0x18] sm:$0xff]
      %v1152 = vld [vmem:[%s1147 + $0x20] sm:$0xff]
      %v1153 = vld [vmem:[%s1147 + $0x28] sm:$0xff]
      %v1154 = vld [vmem:[%s1147 + $0x30] sm:$0xff]
      %v1155 = vld [vmem:[%s1147 + $0x38] sm:$0xff]
      %v1156 = vld [vmem:[%s1147 + $0x40] sm:$0xff]
      %v1157 = vld [vmem:[%s1147 + $0x48] sm:$0xff]
      %v1158 = vld [vmem:[%s1147 + $0x50] sm:$0xff]
      %v1159 = vld [vmem:[%s1147 + $0x58] sm:$0xff]
      %v1160 = vld [vmem:[%s1147 + $0x60] sm:$0xff]
      %v1161 = vld [vmem:[%s1147 + $0x68] sm:$0xff]
      %v1162 = vld [vmem:[%s1147 + $0x70] sm:$0xff]
      %v1163 = vld [vmem:[%s1147 + $0x78] sm:$0xff]
      %1164 = vmatprep.subr.mxu0 0.0
      %1165 = vmatpush1.msra.mxu0 %v1163
      %1166 = vmatprep.subr.mxu0 0.0
      %1167 = vmatpush1.msra.mxu0 %v1162
      %1168 = vmatprep.subr.mxu0 0.0
      %1169 = vmatpush1.msra.mxu0 %v1161
      %1170 = vmatprep.subr.mxu0 0.0
      %1171 = vmatpush1.msra.mxu0 %v1160
      %1172 = vmatprep.subr.mxu0 0.0
      %1173 = vmatpush1.msra.mxu0 %v1159
      %1174 = vmatprep.subr.mxu0 0.0
      %1175 = vmatpush1.msra.mxu0 %v1158
      %1176 = vmatprep.subr.mxu0 0.0
      %1177 = vmatpush1.msra.mxu0 %v1157
      %1178 = vmatprep.subr.mxu0 0.0
      %1179 = vmatpush1.msra.mxu0 %v1156
      %1180 = vmatprep.subr.mxu0 0.0
      %1181 = vmatpush1.msra.mxu0 %v1155
      %1182 = vmatprep.subr.mxu0 0.0
      %1183 = vmatpush1.msra.mxu0 %v1154
      %1184 = vmatprep.subr.mxu0 0.0
      %1185 = vmatpush1.msra.mxu0 %v1153
      %1186 = vmatprep.subr.mxu0 0.0
      %1187 = vmatpush1.msra.mxu0 %v1152
      %1188 = vmatprep.subr.mxu0 0.0
      %1189 = vmatpush1.msra.mxu0 %v1151
      %1190 = vmatprep.subr.mxu0 0.0
      %1191 = vmatpush1.msra.mxu0 %v1150
      %1192 = vmatprep.subr.mxu0 0.0
      %1193 = vmatpush1.msra.mxu0 %v1149
      %1194 = vmatprep.subr.mxu0 0.0
      %1195 = vmatpush1.msra.mxu0 %v1148
      %1196 = vmatprep.subr.mxu0 0.0
      %1197 = vmatpush2.msra.mxu0 0.0
      %1198 = vmatprep.subr.mxu0 0.0
      %1199 = vmatpush2.msra.mxu0 0.0
      %1200 = vmatprep.subr.mxu0 0.0
      %1201 = vmatpush2.msra.mxu0 0.0
      %1202 = vmatprep.subr.mxu0 0.0
      %1203 = vmatpush2.msra.mxu0 0.0
      %1204 = vmatprep.subr.mxu0 0.0
      %1205 = vmatpush2.msra.mxu0 0.0
      %1206 = vmatprep.subr.mxu0 0.0
      %1207 = vmatpush2.msra.mxu0 0.0
      %1208 = vmatprep.subr.mxu0 0.0
      %1209 = vmatpush2.msra.mxu0 0.0
      %1210 = vmatprep.subr.mxu0 0.0
      %1211 = vmatpush2.msra.mxu0 0.0
      %1212 = vmatprep.subr.mxu0 0.0
      %1213 = vmatpush2.msra.mxu0 0.0
      %1214 = vmatprep.subr.mxu0 0.0
      %1215 = vmatpush2.msra.mxu0 0.0
      %1216 = vmatprep.subr.mxu0 0.0
      %1217 = vmatpush2.msra.mxu0 0.0
      %1218 = vmatprep.subr.mxu0 0.0
      %1219 = vmatpush2.msra.mxu0 0.0
      %1220 = vmatprep.subr.mxu0 0.0
      %1221 = vmatpush2.msra.mxu0 0.0
      %1222 = vmatprep.subr.mxu0 0.0
      %1223 = vmatpush2.msra.mxu0 0.0
      %1224 = vmatprep.subr.mxu0 0.0
      %1225 = vmatpush2.msra.mxu0 0.0
      %1226 = vmatprep.subr.mxu0 0.0
      %1227 = vmatpush2.msra.mxu0 0.0
      %1228 = vmatprep.mubr.f32.mxu0 0.0
      %1229 = vmatmul.mubr.f32.gmra.mxu0 %v1093
      %v1230 = vpop.f32.mrf.mxu0
      %v1231 = vadd.f32 0.0, %v1230
      %v1232 = vpop.f32.mrf.mxu0
      %1233 = vmatprep.mubr.f32.mxu0 0.0
      %1234 = vmatmul.mubr.f32.gmra.mxu0 %v1095
      %v1235 = vpop.f32.mrf.mxu0
      %v1236 = vadd.f32 0.0, %v1235
      %v1237 = vpop.f32.mrf.mxu0
      %1238 = vmatprep.mubr.f32.mxu0 0.0
      %1239 = vmatmul.mubr.f32.gmra.mxu0 %v1098
      %v1240 = vpop.f32.mrf.mxu0
      %v1241 = vadd.f32 0.0, %v1240
      %v1242 = vpop.f32.mrf.mxu0
      %1243 = vmatprep.mubr.f32.mxu0 0.0
      %1244 = vmatmul.mubr.f32.gmra.mxu0 %v1100
      %v1245 = vpop.f32.mrf.mxu0
      %v1246 = vadd.f32 0.0, %v1245
      %v1247 = vpop.f32.mrf.mxu0
      %1248 = vmatprep.mubr.f32.mxu0 0.0
      %1249 = vmatmul.mubr.f32.gmra.mxu0 %v1103
      %v1250 = vpop.f32.mrf.mxu0
      %v1251 = vadd.f32 0.0, %v1250
      %v1252 = vpop.f32.mrf.mxu0
      %1253 = vmatprep.mubr.f32.mxu0 0.0
      %1254 = vmatmul.mubr.f32.gmra.mxu0 %v1105
      %v1255 = vpop.f32.mrf.mxu0
      %v1256 = vadd.f32 0.0, %v1255
      %v1257 = vpop.f32.mrf.mxu0
      %1258 = vmatprep.mubr.f32.mxu0 0.0
      %1259 = vmatmul.mubr.f32.gmra.mxu0 %v1108
      %v1260 = vpop.f32.mrf.mxu0
      %v1261 = vadd.f32 0.0, %v1260
      %v1262 = vpop.f32.mrf.mxu0
      %1263 = vmatprep.mubr.f32.mxu0 0.0
      %1264 = vmatmul.mubr.f32.gmra.mxu0 %v1110
      %v1265 = vpop.f32.mrf.mxu0
      %v1266 = vadd.f32 0.0, %v1265
      %v1267 = vpop.f32.mrf.mxu0
      %1268 = vmatprep.mubr.f32.mxu0 0.0
      %1269 = vmatmul.mubr.f32.gmra.mxu0 %v1113
      %v1270 = vpop.f32.mrf.mxu0
      %v1271 = vadd.f32 0.0, %v1270
      %v1272 = vpop.f32.mrf.mxu0
      %1273 = vmatprep.mubr.f32.mxu0 0.0
      %1274 = vmatmul.mubr.f32.gmra.mxu0 %v1115
      %v1275 = vpop.f32.mrf.mxu0
      %v1276 = vadd.f32 0.0, %v1275
      %v1277 = vpop.f32.mrf.mxu0
      %1278 = vmatprep.mubr.f32.mxu0 0.0
      %1279 = vmatmul.mubr.f32.gmra.mxu0 %v1118
      %v1280 = vpop.f32.mrf.mxu0
      %v1281 = vadd.f32 0.0, %v1280
      %v1282 = vpop.f32.mrf.mxu0
      %1283 = vmatprep.mubr.f32.mxu0 0.0
      %1284 = vmatmul.mubr.f32.gmra.mxu0 %v1120
      %v1285 = vpop.f32.mrf.mxu0
      %v1286 = vadd.f32 0.0, %v1285
      %v1287 = vpop.f32.mrf.mxu0
      %1288 = vmatprep.mubr.f32.mxu0 0.0
      %1289 = vmatmul.mubr.f32.gmra.mxu0 %v1123
      %v1290 = vpop.f32.mrf.mxu0
      %v1291 = vadd.f32 0.0, %v1290
      %v1292 = vpop.f32.mrf.mxu0
      %1293 = vmatprep.mubr.f32.mxu0 0.0
      %1294 = vmatmul.mubr.f32.gmra.mxu0 %v1125
      %v1295 = vpop.f32.mrf.mxu0
      %v1296 = vadd.f32 0.0, %v1295
      %v1297 = vpop.f32.mrf.mxu0
      %1298 = vmatprep.mubr.f32.mxu0 0.0
      %1299 = vmatmul.mubr.f32.gmra.mxu0 %v1128
      %v1300 = vpop.f32.mrf.mxu0
      %v1301 = vadd.f32 0.0, %v1300
      %v1302 = vpop.f32.mrf.mxu0
      %1303 = vmatprep.mubr.f32.mxu0 0.0
      %1304 = vmatmul.mubr.f32.gmra.mxu0 %v1130
      %v1305 = vpop.f32.mrf.mxu0
      %v1306 = vadd.f32 0.0, %v1305
      %v1307 = vpop.f32.mrf.mxu0
      %1308 = vdwg.mxu0
      %v1309 = vadd.f32 %v1051, %v1231
      %v1310 = vadd.f32 %v1052, %v1236
      %v1311 = vadd.f32 %v1053, %v1241
      %v1312 = vadd.f32 %v1054, %v1246
      %v1313 = vadd.f32 %v1055, %v1251
      %v1314 = vadd.f32 %v1056, %v1256
      %v1315 = vadd.f32 %v1057, %v1261
      %v1316 = vadd.f32 %v1058, %v1266
      %v1317 = vadd.f32 %v1059, %v1271
      %v1318 = vadd.f32 %v1060, %v1276
      %v1319 = vadd.f32 %v1061, %v1281
      %v1320 = vadd.f32 %v1062, %v1286
      %v1321 = vadd.f32 %v1063, %v1291
      %v1322 = vadd.f32 %v1064, %v1296
      %v1323 = vadd.f32 %v1065, %v1301
      %v1324 = vadd.f32 %v1066, %v1306
      %v1325 = vrot.slane %v865, 2
      %v1326 = vrot.slane %v866, 2
      %v1327 = vsel %vm627, %v1325, %v1326
      %v1328 = vrot.slane %v867, 2
      %v1329 = vsel %vm627, %v1326, %v1328
      %v1330 = vrot.slane %v868, 2
      %v1331 = vrot.slane %v869, 2
      %v1332 = vsel %vm627, %v1330, %v1331
      %v1333 = vrot.slane %v870, 2
      %v1334 = vsel %vm627, %v1331, %v1333
      %v1335 = vrot.slane %v871, 2
      %v1336 = vrot.slane %v872, 2
      %v1337 = vsel %vm627, %v1335, %v1336
      %v1338 = vrot.slane %v873, 2
      %v1339 = vsel %vm627, %v1336, %v1338
      %v1340 = vrot.slane %v874, 2
      %v1341 = vrot.slane %v875, 2
      %v1342 = vsel %vm627, %v1340, %v1341
      %v1343 = vrot.slane %v876, 2
      %v1344 = vsel %vm627, %v1341, %v1343
      %v1345 = vrot.slane %v877, 2
      %v1346 = vrot.slane %v878, 2
      %v1347 = vsel %vm627, %v1345, %v1346
      %v1348 = vrot.slane %v879, 2
      %v1349 = vsel %vm627, %v1346, %v1348
      %v1350 = vrot.slane %v880, 2
      %v1351 = vrot.slane %v881, 2
      %v1352 = vsel %vm627, %v1350, %v1351
      %v1353 = vrot.slane %v882, 2
      %v1354 = vsel %vm627, %v1351, %v1353
      %v1355 = vrot.slane %v883, 2
      %v1356 = vrot.slane %v884, 2
      %v1357 = vsel %vm627, %v1355, %v1356
      %v1358 = vrot.slane %v885, 2
      %v1359 = vsel %vm627, %v1356, %v1358
      %v1360 = vrot.slane %v886, 2
      %v1361 = vrot.slane %v887, 2
      %v1362 = vsel %vm627, %v1360, %v1361
      %v1363 = vrot.slane %v888, 2
      %v1364 = vsel %vm627, %v1361, %v1363
      %s1381 = scalar_lea.vmem %s1, 640
      %v1382 = vld [vmem:[%s1381] sm:$0xff]
      %v1383 = vld [vmem:[%s1381 + $0x8] sm:$0xff]
      %v1384 = vld [vmem:[%s1381 + $0x10] sm:$0xff]
      %v1385 = vld [vmem:[%s1381 + $0x18] sm:$0xff]
      %v1386 = vld [vmem:[%s1381 + $0x20] sm:$0xff]
      %v1387 = vld [vmem:[%s1381 + $0x28] sm:$0xff]
      %v1388 = vld [vmem:[%s1381 + $0x30] sm:$0xff]
      %v1389 = vld [vmem:[%s1381 + $0x38] sm:$0xff]
      %v1390 = vld [vmem:[%s1381 + $0x40] sm:$0xff]
      %v1391 = vld [vmem:[%s1381 + $0x48] sm:$0xff]
      %v1392 = vld [vmem:[%s1381 + $0x50] sm:$0xff]
      %v1393 = vld [vmem:[%s1381 + $0x58] sm:$0xff]
      %v1394 = vld [vmem:[%s1381 + $0x60] sm:$0xff]
      %v1395 = vld [vmem:[%s1381 + $0x68] sm:$0xff]
      %v1396 = vld [vmem:[%s1381 + $0x70] sm:$0xff]
      %v1397 = vld [vmem:[%s1381 + $0x78] sm:$0xff]
      %1398 = vmatprep.subr.mxu0 0.0
      %1399 = vmatpush1.msra.mxu0 %v1397
      %1400 = vmatprep.subr.mxu0 0.0
      %1401 = vmatpush1.msra.mxu0 %v1396
      %1402 = vmatprep.subr.mxu0 0.0
      %1403 = vmatpush1.msra.mxu0 %v1395
      %1404 = vmatprep.subr.mxu0 0.0
      %1405 = vmatpush1.msra.mxu0 %v1394
      %1406 = vmatprep.subr.mxu0 0.0
      %1407 = vmatpush1.msra.mxu0 %v1393
      %1408 = vmatprep.subr.mxu0 0.0
      %1409 = vmatpush1.msra.mxu0 %v1392
      %1410 = vmatprep.subr.mxu0 0.0
      %1411 = vmatpush1.msra.mxu0 %v1391
      %1412 = vmatprep.subr.mxu0 0.0
      %1413 = vmatpush1.msra.mxu0 %v1390
      %1414 = vmatprep.subr.mxu0 0.0
      %1415 = vmatpush1.msra.mxu0 %v1389
      %1416 = vmatprep.subr.mxu0 0.0
      %1417 = vmatpush1.msra.mxu0 %v1388
      %1418 = vmatprep.subr.mxu0 0.0
      %1419 = vmatpush1.msra.mxu0 %v1387
      %1420 = vmatprep.subr.mxu0 0.0
      %1421 = vmatpush1.msra.mxu0 %v1386
      %1422 = vmatprep.subr.mxu0 0.0
      %1423 = vmatpush1.msra.mxu0 %v1385
      %1424 = vmatprep.subr.mxu0 0.0
      %1425 = vmatpush1.msra.mxu0 %v1384
      %1426 = vmatprep.subr.mxu0 0.0
      %1427 = vmatpush1.msra.mxu0 %v1383
      %1428 = vmatprep.subr.mxu0 0.0
      %1429 = vmatpush1.msra.mxu0 %v1382
      %1430 = vmatprep.subr.mxu0 0.0
      %1431 = vmatpush2.msra.mxu0 0.0
      %1432 = vmatprep.subr.mxu0 0.0
      %1433 = vmatpush2.msra.mxu0 0.0
      %1434 = vmatprep.subr.mxu0 0.0
      %1435 = vmatpush2.msra.mxu0 0.0
      %1436 = vmatprep.subr.mxu0 0.0
      %1437 = vmatpush2.msra.mxu0 0.0
      %1438 = vmatprep.subr.mxu0 0.0
      %1439 = vmatpush2.msra.mxu0 0.0
      %1440 = vmatprep.subr.mxu0 0.0
      %1441 = vmatpush2.msra.mxu0 0.0
      %1442 = vmatprep.subr.mxu0 0.0
      %1443 = vmatpush2.msra.mxu0 0.0
      %1444 = vmatprep.subr.mxu0 0.0
      %1445 = vmatpush2.msra.mxu0 0.0
      %1446 = vmatprep.subr.mxu0 0.0
      %1447 = vmatpush2.msra.mxu0 0.0
      %1448 = vmatprep.subr.mxu0 0.0
      %1449 = vmatpush2.msra.mxu0 0.0
      %1450 = vmatprep.subr.mxu0 0.0
      %1451 = vmatpush2.msra.mxu0 0.0
      %1452 = vmatprep.subr.mxu0 0.0
      %1453 = vmatpush2.msra.mxu0 0.0
      %1454 = vmatprep.subr.mxu0 0.0
      %1455 = vmatpush2.msra.mxu0 0.0
      %1456 = vmatprep.subr.mxu0 0.0
      %1457 = vmatpush2.msra.mxu0 0.0
      %1458 = vmatprep.subr.mxu0 0.0
      %1459 = vmatpush2.msra.mxu0 0.0
      %1460 = vmatprep.subr.mxu0 0.0
      %1461 = vmatpush2.msra.mxu0 0.0
      %1462 = vmatprep.mubr.f32.mxu0 0.0
      %1463 = vmatmul.mubr.f32.gmra.mxu0 %v1327
      %v1464 = vpop.f32.mrf.mxu0
      %v1465 = vadd.f32 0.0, %v1464
      %v1466 = vpop.f32.mrf.mxu0
      %1467 = vmatprep.mubr.f32.mxu0 0.0
      %1468 = vmatmul.mubr.f32.gmra.mxu0 %v1329
      %v1469 = vpop.f32.mrf.mxu0
      %v1470 = vadd.f32 0.0, %v1469
      %v1471 = vpop.f32.mrf.mxu0
      %1472 = vmatprep.mubr.f32.mxu0 0.0
      %1473 = vmatmul.mubr.f32.gmra.mxu0 %v1332
      %v1474 = vpop.f32.mrf.mxu0
      %v1475 = vadd.f32 0.0, %v1474
      %v1476 = vpop.f32.mrf.mxu0
      %1477 = vmatprep.mubr.f32.mxu0 0.0
      %1478 = vmatmul.mubr.f32.gmra.mxu0 %v1334
      %v1479 = vpop.f32.mrf.mxu0
      %v1480 = vadd.f32 0.0, %v1479
      %v1481 = vpop.f32.mrf.mxu0
      %1482 = vmatprep.mubr.f32.mxu0 0.0
      %1483 = vmatmul.mubr.f32.gmra.mxu0 %v1337
      %v1484 = vpop.f32.mrf.mxu0
      %v1485 = vadd.f32 0.0, %v1484
      %v1486 = vpop.f32.mrf.mxu0
      %1487 = vmatprep.mubr.f32.mxu0 0.0
      %1488 = vmatmul.mubr.f32.gmra.mxu0 %v1339
      %v1489 = vpop.f32.mrf.mxu0
      %v1490 = vadd.f32 0.0, %v1489
      %v1491 = vpop.f32.mrf.mxu0
      %1492 = vmatprep.mubr.f32.mxu0 0.0
      %1493 = vmatmul.mubr.f32.gmra.mxu0 %v1342
      %v1494 = vpop.f32.mrf.mxu0
      %v1495 = vadd.f32 0.0, %v1494
      %v1496 = vpop.f32.mrf.mxu0
      %1497 = vmatprep.mubr.f32.mxu0 0.0
      %1498 = vmatmul.mubr.f32.gmra.mxu0 %v1344
      %v1499 = vpop.f32.mrf.mxu0
      %v1500 = vadd.f32 0.0, %v1499
      %v1501 = vpop.f32.mrf.mxu0
      %1502 = vmatprep.mubr.f32.mxu0 0.0
      %1503 = vmatmul.mubr.f32.gmra.mxu0 %v1347
      %v1504 = vpop.f32.mrf.mxu0
      %v1505 = vadd.f32 0.0, %v1504
      %v1506 = vpop.f32.mrf.mxu0
      %1507 = vmatprep.mubr.f32.mxu0 0.0
      %1508 = vmatmul.mubr.f32.gmra.mxu0 %v1349
      %v1509 = vpop.f32.mrf.mxu0
      %v1510 = vadd.f32 0.0, %v1509
      %v1511 = vpop.f32.mrf.mxu0
      %1512 = vmatprep.mubr.f32.mxu0 0.0
      %1513 = vmatmul.mubr.f32.gmra.mxu0 %v1352
      %v1514 = vpop.f32.mrf.mxu0
      %v1515 = vadd.f32 0.0, %v1514
      %v1516 = vpop.f32.mrf.mxu0
      %1517 = vmatprep.mubr.f32.mxu0 0.0
      %1518 = vmatmul.mubr.f32.gmra.mxu0 %v1354
      %v1519 = vpop.f32.mrf.mxu0
      %v1520 = vadd.f32 0.0, %v1519
      %v1521 = vpop.f32.mrf.mxu0
      %1522 = vmatprep.mubr.f32.mxu0 0.0
      %1523 = vmatmul.mubr.f32.gmra.mxu0 %v1357
      %v1524 = vpop.f32.mrf.mxu0
      %v1525 = vadd.f32 0.0, %v1524
      %v1526 = vpop.f32.mrf.mxu0
      %1527 = vmatprep.mubr.f32.mxu0 0.0
      %1528 = vmatmul.mubr.f32.gmra.mxu0 %v1359
      %v1529 = vpop.f32.mrf.mxu0
      %v1530 = vadd.f32 0.0, %v1529
      %v1531 = vpop.f32.mrf.mxu0
      %1532 = vmatprep.mubr.f32.mxu0 0.0
      %1533 = vmatmul.mubr.f32.gmra.mxu0 %v1362
      %v1534 = vpop.f32.mrf.mxu0
      %v1535 = vadd.f32 0.0, %v1534
      %v1536 = vpop.f32.mrf.mxu0
      %1537 = vmatprep.mubr.f32.mxu0 0.0
      %1538 = vmatmul.mubr.f32.gmra.mxu0 %v1364
      %v1539 = vpop.f32.mrf.mxu0
      %v1540 = vadd.f32 0.0, %v1539
      %v1541 = vpop.f32.mrf.mxu0
      %1542 = vdwg.mxu0
      %v1543 = vadd.f32 %v1309, %v1465
      %v1544 = vadd.f32 %v1310, %v1470
      %v1545 = vadd.f32 %v1311, %v1475
      %v1546 = vadd.f32 %v1312, %v1480
      %v1547 = vadd.f32 %v1313, %v1485
      %v1548 = vadd.f32 %v1314, %v1490
      %v1549 = vadd.f32 %v1315, %v1495
      %v1550 = vadd.f32 %v1316, %v1500
      %v1551 = vadd.f32 %v1317, %v1505
      %v1552 = vadd.f32 %v1318, %v1510
      %v1553 = vadd.f32 %v1319, %v1515
      %v1554 = vadd.f32 %v1320, %v1520
      %v1555 = vadd.f32 %v1321, %v1525
      %v1556 = vadd.f32 %v1322, %v1530
      %v1557 = vadd.f32 %v1323, %v1535
      %v1558 = vadd.f32 %v1324, %v1540
      %s1559 = sadd.s32 %s196, 2
      %s1560 = smul.u32 %s1559, 24
      %s1561 = scalar_lea.vmem %s184, %s1560
      %v1562 = vld [vmem:[%s1561] sm:$0xff]
      %v1563 = vld [vmem:[%s1561 + $0x8] sm:$0xff]
      %v1564 = vld [vmem:[%s1561 + $0x10] sm:$0x3]
      %v1565 = vld [vmem:[%s1561 + $0x18] sm:$0xff]
      %v1566 = vld [vmem:[%s1561 + $0x20] sm:$0xff]
      %v1567 = vld [vmem:[%s1561 + $0x28] sm:$0x3]
      %v1568 = vld [vmem:[%s1561 + $0x30] sm:$0xff]
      %v1569 = vld [vmem:[%s1561 + $0x38] sm:$0xff]
      %v1570 = vld [vmem:[%s1561 + $0x40] sm:$0x3]
      %v1571 = vld [vmem:[%s1561 + $0x48] sm:$0xff]
      %v1572 = vld [vmem:[%s1561 + $0x50] sm:$0xff]
      %v1573 = vld [vmem:[%s1561 + $0x58] sm:$0x3]
      %v1574 = vld [vmem:[%s1561 + $0x60] sm:$0xff]
      %v1575 = vld [vmem:[%s1561 + $0x68] sm:$0xff]
      %v1576 = vld [vmem:[%s1561 + $0x70] sm:$0x3]
      %v1577 = vld [vmem:[%s1561 + $0x78] sm:$0xff]
      %v1578 = vld [vmem:[%s1561 + $0x80] sm:$0xff]
      %v1579 = vld [vmem:[%s1561 + $0x88] sm:$0x3]
      %v1580 = vld [vmem:[%s1561 + $0x90] sm:$0xff]
      %v1581 = vld [vmem:[%s1561 + $0x98] sm:$0xff]
      %v1582 = vld [vmem:[%s1561 + $0xa0] sm:$0x3]
      %v1583 = vld [vmem:[%s1561 + $0xa8] sm:$0xff]
      %v1584 = vld [vmem:[%s1561 + $0xb0] sm:$0xff]
      %v1585 = vld [vmem:[%s1561 + $0xb8] sm:$0x3]
      %s1586 = scalar_lea.vmem %s1, 768
      %v1587 = vld [vmem:[%s1586] sm:$0xff]
      %v1588 = vld [vmem:[%s1586 + $0x8] sm:$0xff]
      %v1589 = vld [vmem:[%s1586 + $0x10] sm:$0xff]
      %v1590 = vld [vmem:[%s1586 + $0x18] sm:$0xff]
      %v1591 = vld [vmem:[%s1586 + $0x20] sm:$0xff]
      %v1592 = vld [vmem:[%s1586 + $0x28] sm:$0xff]
      %v1593 = vld [vmem:[%s1586 + $0x30] sm:$0xff]
      %v1594 = vld [vmem:[%s1586 + $0x38] sm:$0xff]
      %v1595 = vld [vmem:[%s1586 + $0x40] sm:$0xff]
      %v1596 = vld [vmem:[%s1586 + $0x48] sm:$0xff]
      %v1597 = vld [vmem:[%s1586 + $0x50] sm:$0xff]
      %v1598 = vld [vmem:[%s1586 + $0x58] sm:$0xff]
      %v1599 = vld [vmem:[%s1586 + $0x60] sm:$0xff]
      %v1600 = vld [vmem:[%s1586 + $0x68] sm:$0xff]
      %v1601 = vld [vmem:[%s1586 + $0x70] sm:$0xff]
      %v1602 = vld [vmem:[%s1586 + $0x78] sm:$0xff]
      %1603 = vmatprep.subr.mxu0 0.0
      %1604 = vmatpush1.msra.mxu0 %v1602
      %1605 = vmatprep.subr.mxu0 0.0
      %1606 = vmatpush1.msra.mxu0 %v1601
      %1607 = vmatprep.subr.mxu0 0.0
      %1608 = vmatpush1.msra.mxu0 %v1600
      %1609 = vmatprep.subr.mxu0 0.0
      %1610 = vmatpush1.msra.mxu0 %v1599
      %1611 = vmatprep.subr.mxu0 0.0
      %1612 = vmatpush1.msra.mxu0 %v1598
      %1613 = vmatprep.subr.mxu0 0.0
      %1614 = vmatpush1.msra.mxu0 %v1597
      %1615 = vmatprep.subr.mxu0 0.0
      %1616 = vmatpush1.msra.mxu0 %v1596
      %1617 = vmatprep.subr.mxu0 0.0
      %1618 = vmatpush1.msra.mxu0 %v1595
      %1619 = vmatprep.subr.mxu0 0.0
      %1620 = vmatpush1.msra.mxu0 %v1594
      %1621 = vmatprep.subr.mxu0 0.0
      %1622 = vmatpush1.msra.mxu0 %v1593
      %1623 = vmatprep.subr.mxu0 0.0
      %1624 = vmatpush1.msra.mxu0 %v1592
      %1625 = vmatprep.subr.mxu0 0.0
      %1626 = vmatpush1.msra.mxu0 %v1591
      %1627 = vmatprep.subr.mxu0 0.0
      %1628 = vmatpush1.msra.mxu0 %v1590
      %1629 = vmatprep.subr.mxu0 0.0
      %1630 = vmatpush1.msra.mxu0 %v1589
      %1631 = vmatprep.subr.mxu0 0.0
      %1632 = vmatpush1.msra.mxu0 %v1588
      %1633 = vmatprep.subr.mxu0 0.0
      %1634 = vmatpush1.msra.mxu0 %v1587
      %1635 = vmatprep.subr.mxu0 0.0
      %1636 = vmatpush2.msra.mxu0 0.0
      %1637 = vmatprep.subr.mxu0 0.0
      %1638 = vmatpush2.msra.mxu0 0.0
      %1639 = vmatprep.subr.mxu0 0.0
      %1640 = vmatpush2.msra.mxu0 0.0
      %1641 = vmatprep.subr.mxu0 0.0
      %1642 = vmatpush2.msra.mxu0 0.0
      %1643 = vmatprep.subr.mxu0 0.0
      %1644 = vmatpush2.msra.mxu0 0.0
      %1645 = vmatprep.subr.mxu0 0.0
      %1646 = vmatpush2.msra.mxu0 0.0
      %1647 = vmatprep.subr.mxu0 0.0
      %1648 = vmatpush2.msra.mxu0 0.0
      %1649 = vmatprep.subr.mxu0 0.0
      %1650 = vmatpush2.msra.mxu0 0.0
      %1651 = vmatprep.subr.mxu0 0.0
      %1652 = vmatpush2.msra.mxu0 0.0
      %1653 = vmatprep.subr.mxu0 0.0
      %1654 = vmatpush2.msra.mxu0 0.0
      %1655 = vmatprep.subr.mxu0 0.0
      %1656 = vmatpush2.msra.mxu0 0.0
      %1657 = vmatprep.subr.mxu0 0.0
      %1658 = vmatpush2.msra.mxu0 0.0
      %1659 = vmatprep.subr.mxu0 0.0
      %1660 = vmatpush2.msra.mxu0 0.0
      %1661 = vmatprep.subr.mxu0 0.0
      %1662 = vmatpush2.msra.mxu0 0.0
      %1663 = vmatprep.subr.mxu0 0.0
      %1664 = vmatpush2.msra.mxu0 0.0
      %1665 = vmatprep.subr.mxu0 0.0
      %1666 = vmatpush2.msra.mxu0 0.0
      %1667 = vmatprep.mubr.f32.mxu0 0.0
      %1668 = vmatmul.mubr.f32.gmra.mxu0 %v1562
      %v1669 = vpop.f32.mrf.mxu0
      %v1670 = vadd.f32 0.0, %v1669
      %v1671 = vpop.f32.mrf.mxu0
      %1672 = vmatprep.mubr.f32.mxu0 0.0
      %1673 = vmatmul.mubr.f32.gmra.mxu0 %v1563
      %v1674 = vpop.f32.mrf.mxu0
      %v1675 = vadd.f32 0.0, %v1674
      %v1676 = vpop.f32.mrf.mxu0
      %1677 = vmatprep.mubr.f32.mxu0 0.0
      %1678 = vmatmul.mubr.f32.gmra.mxu0 %v1565
      %v1679 = vpop.f32.mrf.mxu0
      %v1680 = vadd.f32 0.0, %v1679
      %v1681 = vpop.f32.mrf.mxu0
      %1682 = vmatprep.mubr.f32.mxu0 0.0
      %1683 = vmatmul.mubr.f32.gmra.mxu0 %v1566
      %v1684 = vpop.f32.mrf.mxu0
      %v1685 = vadd.f32 0.0, %v1684
      %v1686 = vpop.f32.mrf.mxu0
      %1687 = vmatprep.mubr.f32.mxu0 0.0
      %1688 = vmatmul.mubr.f32.gmra.mxu0 %v1568
      %v1689 = vpop.f32.mrf.mxu0
      %v1690 = vadd.f32 0.0, %v1689
      %v1691 = vpop.f32.mrf.mxu0
      %1692 = vmatprep.mubr.f32.mxu0 0.0
      %1693 = vmatmul.mubr.f32.gmra.mxu0 %v1569
      %v1694 = vpop.f32.mrf.mxu0
      %v1695 = vadd.f32 0.0, %v1694
      %v1696 = vpop.f32.mrf.mxu0
      %1697 = vmatprep.mubr.f32.mxu0 0.0
      %1698 = vmatmul.mubr.f32.gmra.mxu0 %v1571
      %v1699 = vpop.f32.mrf.mxu0
      %v1700 = vadd.f32 0.0, %v1699
      %v1701 = vpop.f32.mrf.mxu0
      %1702 = vmatprep.mubr.f32.mxu0 0.0
      %1703 = vmatmul.mubr.f32.gmra.mxu0 %v1572
      %v1704 = vpop.f32.mrf.mxu0
      %v1705 = vadd.f32 0.0, %v1704
      %v1706 = vpop.f32.mrf.mxu0
      %1707 = vmatprep.mubr.f32.mxu0 0.0
      %1708 = vmatmul.mubr.f32.gmra.mxu0 %v1574
      %v1709 = vpop.f32.mrf.mxu0
      %v1710 = vadd.f32 0.0, %v1709
      %v1711 = vpop.f32.mrf.mxu0
      %1712 = vmatprep.mubr.f32.mxu0 0.0
      %1713 = vmatmul.mubr.f32.gmra.mxu0 %v1575
      %v1714 = vpop.f32.mrf.mxu0
      %v1715 = vadd.f32 0.0, %v1714
      %v1716 = vpop.f32.mrf.mxu0
      %1717 = vmatprep.mubr.f32.mxu0 0.0
      %1718 = vmatmul.mubr.f32.gmra.mxu0 %v1577
      %v1719 = vpop.f32.mrf.mxu0
      %v1720 = vadd.f32 0.0, %v1719
      %v1721 = vpop.f32.mrf.mxu0
      %1722 = vmatprep.mubr.f32.mxu0 0.0
      %1723 = vmatmul.mubr.f32.gmra.mxu0 %v1578
      %v1724 = vpop.f32.mrf.mxu0
      %v1725 = vadd.f32 0.0, %v1724
      %v1726 = vpop.f32.mrf.mxu0
      %1727 = vmatprep.mubr.f32.mxu0 0.0
      %1728 = vmatmul.mubr.f32.gmra.mxu0 %v1580
      %v1729 = vpop.f32.mrf.mxu0
      %v1730 = vadd.f32 0.0, %v1729
      %v1731 = vpop.f32.mrf.mxu0
      %1732 = vmatprep.mubr.f32.mxu0 0.0
      %1733 = vmatmul.mubr.f32.gmra.mxu0 %v1581
      %v1734 = vpop.f32.mrf.mxu0
      %v1735 = vadd.f32 0.0, %v1734
      %v1736 = vpop.f32.mrf.mxu0
      %1737 = vmatprep.mubr.f32.mxu0 0.0
      %1738 = vmatmul.mubr.f32.gmra.mxu0 %v1583
      %v1739 = vpop.f32.mrf.mxu0
      %v1740 = vadd.f32 0.0, %v1739
      %v1741 = vpop.f32.mrf.mxu0
      %1742 = vmatprep.mubr.f32.mxu0 0.0
      %1743 = vmatmul.mubr.f32.gmra.mxu0 %v1584
      %v1744 = vpop.f32.mrf.mxu0
      %v1745 = vadd.f32 0.0, %v1744
      %v1746 = vpop.f32.mrf.mxu0
      %1747 = vdwg.mxu0
      %v1748 = vadd.f32 %v1543, %v1670
      %v1749 = vadd.f32 %v1544, %v1675
      %v1750 = vadd.f32 %v1545, %v1680
      %v1751 = vadd.f32 %v1546, %v1685
      %v1752 = vadd.f32 %v1547, %v1690
      %v1753 = vadd.f32 %v1548, %v1695
      %v1754 = vadd.f32 %v1549, %v1700
      %v1755 = vadd.f32 %v1550, %v1705
      %v1756 = vadd.f32 %v1551, %v1710
      %v1757 = vadd.f32 %v1552, %v1715
      %v1758 = vadd.f32 %v1553, %v1720
      %v1759 = vadd.f32 %v1554, %v1725
      %v1760 = vadd.f32 %v1555, %v1730
      %v1761 = vadd.f32 %v1556, %v1735
      %v1762 = vadd.f32 %v1557, %v1740
      %v1763 = vadd.f32 %v1558, %v1745
      %v1788 = vrot.slane %v1562, 1
      %v1789 = vrot.slane %v1563, 1
      %v1790 = vsel %vm263, %v1788, %v1789
      %v1791 = vrot.slane %v1564, 1
      %v1792 = vsel %vm263, %v1789, %v1791
      %v1793 = vrot.slane %v1565, 1
      %v1794 = vrot.slane %v1566, 1
      %v1795 = vsel %vm263, %v1793, %v1794
      %v1796 = vrot.slane %v1567, 1
      %v1797 = vsel %vm263, %v1794, %v1796
      %v1798 = vrot.slane %v1568, 1
      %v1799 = vrot.slane %v1569, 1
      %v1800 = vsel %vm263, %v1798, %v1799
      %v1801 = vrot.slane %v1570, 1
      %v1802 = vsel %vm263, %v1799, %v1801
      %v1803 = vrot.slane %v1571, 1
      %v1804 = vrot.slane %v1572, 1
      %v1805 = vsel %vm263, %v1803, %v1804
      %v1806 = vrot.slane %v1573, 1
      %v1807 = vsel %vm263, %v1804, %v1806
      %v1808 = vrot.slane %v1574, 1
      %v1809 = vrot.slane %v1575, 1
      %v1810 = vsel %vm263, %v1808, %v1809
      %v1811 = vrot.slane %v1576, 1
      %v1812 = vsel %vm263, %v1809, %v1811
      %v1813 = vrot.slane %v1577, 1
      %v1814 = vrot.slane %v1578, 1
      %v1815 = vsel %vm263, %v1813, %v1814
      %v1816 = vrot.slane %v1579, 1
      %v1817 = vsel %vm263, %v1814, %v1816
      %v1818 = vrot.slane %v1580, 1
      %v1819 = vrot.slane %v1581, 1
      %v1820 = vsel %vm263, %v1818, %v1819
      %v1821 = vrot.slane %v1582, 1
      %v1822 = vsel %vm263, %v1819, %v1821
      %v1823 = vrot.slane %v1583, 1
      %v1824 = vrot.slane %v1584, 1
      %v1825 = vsel %vm263, %v1823, %v1824
      %v1826 = vrot.slane %v1585, 1
      %v1827 = vsel %vm263, %v1824, %v1826
      %s1844 = scalar_lea.vmem %s1, 896
      %v1845 = vld [vmem:[%s1844] sm:$0xff]
      %v1846 = vld [vmem:[%s1844 + $0x8] sm:$0xff]
      %v1847 = vld [vmem:[%s1844 + $0x10] sm:$0xff]
      %v1848 = vld [vmem:[%s1844 + $0x18] sm:$0xff]
      %v1849 = vld [vmem:[%s1844 + $0x20] sm:$0xff]
      %v1850 = vld [vmem:[%s1844 + $0x28] sm:$0xff]
      %v1851 = vld [vmem:[%s1844 + $0x30] sm:$0xff]
      %v1852 = vld [vmem:[%s1844 + $0x38] sm:$0xff]
      %v1853 = vld [vmem:[%s1844 + $0x40] sm:$0xff]
      %v1854 = vld [vmem:[%s1844 + $0x48] sm:$0xff]
      %v1855 = vld [vmem:[%s1844 + $0x50] sm:$0xff]
      %v1856 = vld [vmem:[%s1844 + $0x58] sm:$0xff]
      %v1857 = vld [vmem:[%s1844 + $0x60] sm:$0xff]
      %v1858 = vld [vmem:[%s1844 + $0x68] sm:$0xff]
      %v1859 = vld [vmem:[%s1844 + $0x70] sm:$0xff]
      %v1860 = vld [vmem:[%s1844 + $0x78] sm:$0xff]
      %1861 = vmatprep.subr.mxu0 0.0
      %1862 = vmatpush1.msra.mxu0 %v1860
      %1863 = vmatprep.subr.mxu0 0.0
      %1864 = vmatpush1.msra.mxu0 %v1859
      %1865 = vmatprep.subr.mxu0 0.0
      %1866 = vmatpush1.msra.mxu0 %v1858
      %1867 = vmatprep.subr.mxu0 0.0
      %1868 = vmatpush1.msra.mxu0 %v1857
      %1869 = vmatprep.subr.mxu0 0.0
      %1870 = vmatpush1.msra.mxu0 %v1856
      %1871 = vmatprep.subr.mxu0 0.0
      %1872 = vmatpush1.msra.mxu0 %v1855
      %1873 = vmatprep.subr.mxu0 0.0
      %1874 = vmatpush1.msra.mxu0 %v1854
      %1875 = vmatprep.subr.mxu0 0.0
      %1876 = vmatpush1.msra.mxu0 %v1853
      %1877 = vmatprep.subr.mxu0 0.0
      %1878 = vmatpush1.msra.mxu0 %v1852
      %1879 = vmatprep.subr.mxu0 0.0
      %1880 = vmatpush1.msra.mxu0 %v1851
      %1881 = vmatprep.subr.mxu0 0.0
      %1882 = vmatpush1.msra.mxu0 %v1850
      %1883 = vmatprep.subr.mxu0 0.0
      %1884 = vmatpush1.msra.mxu0 %v1849
      %1885 = vmatprep.subr.mxu0 0.0
      %1886 = vmatpush1.msra.mxu0 %v1848
      %1887 = vmatprep.subr.mxu0 0.0
      %1888 = vmatpush1.msra.mxu0 %v1847
      %1889 = vmatprep.subr.mxu0 0.0
      %1890 = vmatpush1.msra.mxu0 %v1846
      %1891 = vmatprep.subr.mxu0 0.0
      %1892 = vmatpush1.msra.mxu0 %v1845
      %1893 = vmatprep.subr.mxu0 0.0
      %1894 = vmatpush2.msra.mxu0 0.0
      %1895 = vmatprep.subr.mxu0 0.0
      %1896 = vmatpush2.msra.mxu0 0.0
      %1897 = vmatprep.subr.mxu0 0.0
      %1898 = vmatpush2.msra.mxu0 0.0
      %1899 = vmatprep.subr.mxu0 0.0
      %1900 = vmatpush2.msra.mxu0 0.0
      %1901 = vmatprep.subr.mxu0 0.0
      %1902 = vmatpush2.msra.mxu0 0.0
      %1903 = vmatprep.subr.mxu0 0.0
      %1904 = vmatpush2.msra.mxu0 0.0
      %1905 = vmatprep.subr.mxu0 0.0
      %1906 = vmatpush2.msra.mxu0 0.0
      %1907 = vmatprep.subr.mxu0 0.0
      %1908 = vmatpush2.msra.mxu0 0.0
      %1909 = vmatprep.subr.mxu0 0.0
      %1910 = vmatpush2.msra.mxu0 0.0
      %1911 = vmatprep.subr.mxu0 0.0
      %1912 = vmatpush2.msra.mxu0 0.0
      %1913 = vmatprep.subr.mxu0 0.0
      %1914 = vmatpush2.msra.mxu0 0.0
      %1915 = vmatprep.subr.mxu0 0.0
      %1916 = vmatpush2.msra.mxu0 0.0
      %1917 = vmatprep.subr.mxu0 0.0
      %1918 = vmatpush2.msra.mxu0 0.0
      %1919 = vmatprep.subr.mxu0 0.0
      %1920 = vmatpush2.msra.mxu0 0.0
      %1921 = vmatprep.subr.mxu0 0.0
      %1922 = vmatpush2.msra.mxu0 0.0
      %1923 = vmatprep.subr.mxu0 0.0
      %1924 = vmatpush2.msra.mxu0 0.0
      %1925 = vmatprep.mubr.f32.mxu0 0.0
      %1926 = vmatmul.mubr.f32.gmra.mxu0 %v1790
      %v1927 = vpop.f32.mrf.mxu0
      %v1928 = vadd.f32 0.0, %v1927
      %v1929 = vpop.f32.mrf.mxu0
      %1930 = vmatprep.mubr.f32.mxu0 0.0
      %1931 = vmatmul.mubr.f32.gmra.mxu0 %v1792
      %v1932 = vpop.f32.mrf.mxu0
      %v1933 = vadd.f32 0.0, %v1932
      %v1934 = vpop.f32.mrf.mxu0
      %1935 = vmatprep.mubr.f32.mxu0 0.0
      %1936 = vmatmul.mubr.f32.gmra.mxu0 %v1795
      %v1937 = vpop.f32.mrf.mxu0
      %v1938 = vadd.f32 0.0, %v1937
      %v1939 = vpop.f32.mrf.mxu0
      %1940 = vmatprep.mubr.f32.mxu0 0.0
      %1941 = vmatmul.mubr.f32.gmra.mxu0 %v1797
      %v1942 = vpop.f32.mrf.mxu0
      %v1943 = vadd.f32 0.0, %v1942
      %v1944 = vpop.f32.mrf.mxu0
      %1945 = vmatprep.mubr.f32.mxu0 0.0
      %1946 = vmatmul.mubr.f32.gmra.mxu0 %v1800
      %v1947 = vpop.f32.mrf.mxu0
      %v1948 = vadd.f32 0.0, %v1947
      %v1949 = vpop.f32.mrf.mxu0
      %1950 = vmatprep.mubr.f32.mxu0 0.0
      %1951 = vmatmul.mubr.f32.gmra.mxu0 %v1802
      %v1952 = vpop.f32.mrf.mxu0
      %v1953 = vadd.f32 0.0, %v1952
      %v1954 = vpop.f32.mrf.mxu0
      %1955 = vmatprep.mubr.f32.mxu0 0.0
      %1956 = vmatmul.mubr.f32.gmra.mxu0 %v1805
      %v1957 = vpop.f32.mrf.mxu0
      %v1958 = vadd.f32 0.0, %v1957
      %v1959 = vpop.f32.mrf.mxu0
      %1960 = vmatprep.mubr.f32.mxu0 0.0
      %1961 = vmatmul.mubr.f32.gmra.mxu0 %v1807
      %v1962 = vpop.f32.mrf.mxu0
      %v1963 = vadd.f32 0.0, %v1962
      %v1964 = vpop.f32.mrf.mxu0
      %1965 = vmatprep.mubr.f32.mxu0 0.0
      %1966 = vmatmul.mubr.f32.gmra.mxu0 %v1810
      %v1967 = vpop.f32.mrf.mxu0
      %v1968 = vadd.f32 0.0, %v1967
      %v1969 = vpop.f32.mrf.mxu0
      %1970 = vmatprep.mubr.f32.mxu0 0.0
      %1971 = vmatmul.mubr.f32.gmra.mxu0 %v1812
      %v1972 = vpop.f32.mrf.mxu0
      %v1973 = vadd.f32 0.0, %v1972
      %v1974 = vpop.f32.mrf.mxu0
      %1975 = vmatprep.mubr.f32.mxu0 0.0
      %1976 = vmatmul.mubr.f32.gmra.mxu0 %v1815
      %v1977 = vpop.f32.mrf.mxu0
      %v1978 = vadd.f32 0.0, %v1977
      %v1979 = vpop.f32.mrf.mxu0
      %1980 = vmatprep.mubr.f32.mxu0 0.0
      %1981 = vmatmul.mubr.f32.gmra.mxu0 %v1817
      %v1982 = vpop.f32.mrf.mxu0
      %v1983 = vadd.f32 0.0, %v1982
      %v1984 = vpop.f32.mrf.mxu0
      %1985 = vmatprep.mubr.f32.mxu0 0.0
      %1986 = vmatmul.mubr.f32.gmra.mxu0 %v1820
      %v1987 = vpop.f32.mrf.mxu0
      %v1988 = vadd.f32 0.0, %v1987
      %v1989 = vpop.f32.mrf.mxu0
      %1990 = vmatprep.mubr.f32.mxu0 0.0
      %1991 = vmatmul.mubr.f32.gmra.mxu0 %v1822
      %v1992 = vpop.f32.mrf.mxu0
      %v1993 = vadd.f32 0.0, %v1992
      %v1994 = vpop.f32.mrf.mxu0
      %1995 = vmatprep.mubr.f32.mxu0 0.0
      %1996 = vmatmul.mubr.f32.gmra.mxu0 %v1825
      %v1997 = vpop.f32.mrf.mxu0
      %v1998 = vadd.f32 0.0, %v1997
      %v1999 = vpop.f32.mrf.mxu0
      %2000 = vmatprep.mubr.f32.mxu0 0.0
      %2001 = vmatmul.mubr.f32.gmra.mxu0 %v1827
      %v2002 = vpop.f32.mrf.mxu0
      %v2003 = vadd.f32 0.0, %v2002
      %v2004 = vpop.f32.mrf.mxu0
      %2005 = vdwg.mxu0
      %v2006 = vadd.f32 %v1748, %v1928
      %v2007 = vadd.f32 %v1749, %v1933
      %v2008 = vadd.f32 %v1750, %v1938
      %v2009 = vadd.f32 %v1751, %v1943
      %v2010 = vadd.f32 %v1752, %v1948
      %v2011 = vadd.f32 %v1753, %v1953
      %v2012 = vadd.f32 %v1754, %v1958
      %v2013 = vadd.f32 %v1755, %v1963
      %v2014 = vadd.f32 %v1756, %v1968
      %v2015 = vadd.f32 %v1757, %v1973
      %v2016 = vadd.f32 %v1758, %v1978
      %v2017 = vadd.f32 %v1759, %v1983
      %v2018 = vadd.f32 %v1760, %v1988
      %v2019 = vadd.f32 %v1761, %v1993
      %v2020 = vadd.f32 %v1762, %v1998
      %v2021 = vadd.f32 %v1763, %v2003
      %v2022 = vrot.slane %v1562, 2
      %v2023 = vrot.slane %v1563, 2
      %v2024 = vsel %vm627, %v2022, %v2023
      %v2025 = vrot.slane %v1564, 2
      %v2026 = vsel %vm627, %v2023, %v2025
      %v2027 = vrot.slane %v1565, 2
      %v2028 = vrot.slane %v1566, 2
      %v2029 = vsel %vm627, %v2027, %v2028
      %v2030 = vrot.slane %v1567, 2
      %v2031 = vsel %vm627, %v2028, %v2030
      %v2032 = vrot.slane %v1568, 2
      %v2033 = vrot.slane %v1569, 2
      %v2034 = vsel %vm627, %v2032, %v2033
      %v2035 = vrot.slane %v1570, 2
      %v2036 = vsel %vm627, %v2033, %v2035
      %v2037 = vrot.slane %v1571, 2
      %v2038 = vrot.slane %v1572, 2
      %v2039 = vsel %vm627, %v2037, %v2038
      %v2040 = vrot.slane %v1573, 2
      %v2041 = vsel %vm627, %v2038, %v2040
      %v2042 = vrot.slane %v1574, 2
      %v2043 = vrot.slane %v1575, 2
      %v2044 = vsel %vm627, %v2042, %v2043
      %v2045 = vrot.slane %v1576, 2
      %v2046 = vsel %vm627, %v2043, %v2045
      %v2047 = vrot.slane %v1577, 2
      %v2048 = vrot.slane %v1578, 2
      %v2049 = vsel %vm627, %v2047, %v2048
      %v2050 = vrot.slane %v1579, 2
      %v2051 = vsel %vm627, %v2048, %v2050
      %v2052 = vrot.slane %v1580, 2
      %v2053 = vrot.slane %v1581, 2
      %v2054 = vsel %vm627, %v2052, %v2053
      %v2055 = vrot.slane %v1582, 2
      %v2056 = vsel %vm627, %v2053, %v2055
      %v2057 = vrot.slane %v1583, 2
      %v2058 = vrot.slane %v1584, 2
      %v2059 = vsel %vm627, %v2057, %v2058
      %v2060 = vrot.slane %v1585, 2
      %v2061 = vsel %vm627, %v2058, %v2060
      %s2078 = scalar_lea.vmem %s1, 1024
      %v2079 = vld [vmem:[%s2078] sm:$0xff]
      %v2080 = vld [vmem:[%s2078 + $0x8] sm:$0xff]
      %v2081 = vld [vmem:[%s2078 + $0x10] sm:$0xff]
      %v2082 = vld [vmem:[%s2078 + $0x18] sm:$0xff]
      %v2083 = vld [vmem:[%s2078 + $0x20] sm:$0xff]
      %v2084 = vld [vmem:[%s2078 + $0x28] sm:$0xff]
      %v2085 = vld [vmem:[%s2078 + $0x30] sm:$0xff]
      %v2086 = vld [vmem:[%s2078 + $0x38] sm:$0xff]
      %v2087 = vld [vmem:[%s2078 + $0x40] sm:$0xff]
      %v2088 = vld [vmem:[%s2078 + $0x48] sm:$0xff]
      %v2089 = vld [vmem:[%s2078 + $0x50] sm:$0xff]
      %v2090 = vld [vmem:[%s2078 + $0x58] sm:$0xff]
      %v2091 = vld [vmem:[%s2078 + $0x60] sm:$0xff]
      %v2092 = vld [vmem:[%s2078 + $0x68] sm:$0xff]
      %v2093 = vld [vmem:[%s2078 + $0x70] sm:$0xff]
      %v2094 = vld [vmem:[%s2078 + $0x78] sm:$0xff]
      %2095 = vmatprep.subr.mxu0 0.0
      %2096 = vmatpush1.msra.mxu0 %v2094
      %2097 = vmatprep.subr.mxu0 0.0
      %2098 = vmatpush1.msra.mxu0 %v2093
      %2099 = vmatprep.subr.mxu0 0.0
      %2100 = vmatpush1.msra.mxu0 %v2092
      %2101 = vmatprep.subr.mxu0 0.0
      %2102 = vmatpush1.msra.mxu0 %v2091
      %2103 = vmatprep.subr.mxu0 0.0
      %2104 = vmatpush1.msra.mxu0 %v2090
      %2105 = vmatprep.subr.mxu0 0.0
      %2106 = vmatpush1.msra.mxu0 %v2089
      %2107 = vmatprep.subr.mxu0 0.0
      %2108 = vmatpush1.msra.mxu0 %v2088
      %2109 = vmatprep.subr.mxu0 0.0
      %2110 = vmatpush1.msra.mxu0 %v2087
      %2111 = vmatprep.subr.mxu0 0.0
      %2112 = vmatpush1.msra.mxu0 %v2086
      %2113 = vmatprep.subr.mxu0 0.0
      %2114 = vmatpush1.msra.mxu0 %v2085
      %2115 = vmatprep.subr.mxu0 0.0
      %2116 = vmatpush1.msra.mxu0 %v2084
      %2117 = vmatprep.subr.mxu0 0.0
      %2118 = vmatpush1.msra.mxu0 %v2083
      %2119 = vmatprep.subr.mxu0 0.0
      %2120 = vmatpush1.msra.mxu0 %v2082
      %2121 = vmatprep.subr.mxu0 0.0
      %2122 = vmatpush1.msra.mxu0 %v2081
      %2123 = vmatprep.subr.mxu0 0.0
      %2124 = vmatpush1.msra.mxu0 %v2080
      %2125 = vmatprep.subr.mxu0 0.0
      %2126 = vmatpush1.msra.mxu0 %v2079
      %2127 = vmatprep.subr.mxu0 0.0
      %2128 = vmatpush2.msra.mxu0 0.0
      %2129 = vmatprep.subr.mxu0 0.0
      %2130 = vmatpush2.msra.mxu0 0.0
      %2131 = vmatprep.subr.mxu0 0.0
      %2132 = vmatpush2.msra.mxu0 0.0
      %2133 = vmatprep.subr.mxu0 0.0
      %2134 = vmatpush2.msra.mxu0 0.0
      %2135 = vmatprep.subr.mxu0 0.0
      %2136 = vmatpush2.msra.mxu0 0.0
      %2137 = vmatprep.subr.mxu0 0.0
      %2138 = vmatpush2.msra.mxu0 0.0
      %2139 = vmatprep.subr.mxu0 0.0
      %2140 = vmatpush2.msra.mxu0 0.0
      %2141 = vmatprep.subr.mxu0 0.0
      %2142 = vmatpush2.msra.mxu0 0.0
      %2143 = vmatprep.subr.mxu0 0.0
      %2144 = vmatpush2.msra.mxu0 0.0
      %2145 = vmatprep.subr.mxu0 0.0
      %2146 = vmatpush2.msra.mxu0 0.0
      %2147 = vmatprep.subr.mxu0 0.0
      %2148 = vmatpush2.msra.mxu0 0.0
      %2149 = vmatprep.subr.mxu0 0.0
      %2150 = vmatpush2.msra.mxu0 0.0
      %2151 = vmatprep.subr.mxu0 0.0
      %2152 = vmatpush2.msra.mxu0 0.0
      %2153 = vmatprep.subr.mxu0 0.0
      %2154 = vmatpush2.msra.mxu0 0.0
      %2155 = vmatprep.subr.mxu0 0.0
      %2156 = vmatpush2.msra.mxu0 0.0
      %2157 = vmatprep.subr.mxu0 0.0
      %2158 = vmatpush2.msra.mxu0 0.0
      %2159 = vmatprep.mubr.f32.mxu0 0.0
      %2160 = vmatmul.mubr.f32.gmra.mxu0 %v2024
      %v2161 = vpop.f32.mrf.mxu0
      %v2162 = vadd.f32 0.0, %v2161
      %v2163 = vpop.f32.mrf.mxu0
      %2164 = vmatprep.mubr.f32.mxu0 0.0
      %2165 = vmatmul.mubr.f32.gmra.mxu0 %v2026
      %v2166 = vpop.f32.mrf.mxu0
      %v2167 = vadd.f32 0.0, %v2166
      %v2168 = vpop.f32.mrf.mxu0
      %2169 = vmatprep.mubr.f32.mxu0 0.0
      %2170 = vmatmul.mubr.f32.gmra.mxu0 %v2029
      %v2171 = vpop.f32.mrf.mxu0
      %v2172 = vadd.f32 0.0, %v2171
      %v2173 = vpop.f32.mrf.mxu0
      %2174 = vmatprep.mubr.f32.mxu0 0.0
      %2175 = vmatmul.mubr.f32.gmra.mxu0 %v2031
      %v2176 = vpop.f32.mrf.mxu0
      %v2177 = vadd.f32 0.0, %v2176
      %v2178 = vpop.f32.mrf.mxu0
      %2179 = vmatprep.mubr.f32.mxu0 0.0
      %2180 = vmatmul.mubr.f32.gmra.mxu0 %v2034
      %v2181 = vpop.f32.mrf.mxu0
      %v2182 = vadd.f32 0.0, %v2181
      %v2183 = vpop.f32.mrf.mxu0
      %2184 = vmatprep.mubr.f32.mxu0 0.0
      %2185 = vmatmul.mubr.f32.gmra.mxu0 %v2036
      %v2186 = vpop.f32.mrf.mxu0
      %v2187 = vadd.f32 0.0, %v2186
      %v2188 = vpop.f32.mrf.mxu0
      %2189 = vmatprep.mubr.f32.mxu0 0.0
      %2190 = vmatmul.mubr.f32.gmra.mxu0 %v2039
      %v2191 = vpop.f32.mrf.mxu0
      %v2192 = vadd.f32 0.0, %v2191
      %v2193 = vpop.f32.mrf.mxu0
      %2194 = vmatprep.mubr.f32.mxu0 0.0
      %2195 = vmatmul.mubr.f32.gmra.mxu0 %v2041
      %v2196 = vpop.f32.mrf.mxu0
      %v2197 = vadd.f32 0.0, %v2196
      %v2198 = vpop.f32.mrf.mxu0
      %2199 = vmatprep.mubr.f32.mxu0 0.0
      %2200 = vmatmul.mubr.f32.gmra.mxu0 %v2044
      %v2201 = vpop.f32.mrf.mxu0
      %v2202 = vadd.f32 0.0, %v2201
      %v2203 = vpop.f32.mrf.mxu0
      %2204 = vmatprep.mubr.f32.mxu0 0.0
      %2205 = vmatmul.mubr.f32.gmra.mxu0 %v2046
      %v2206 = vpop.f32.mrf.mxu0
      %v2207 = vadd.f32 0.0, %v2206
      %v2208 = vpop.f32.mrf.mxu0
      %2209 = vmatprep.mubr.f32.mxu0 0.0
      %2210 = vmatmul.mubr.f32.gmra.mxu0 %v2049
      %v2211 = vpop.f32.mrf.mxu0
      %v2212 = vadd.f32 0.0, %v2211
      %v2213 = vpop.f32.mrf.mxu0
      %2214 = vmatprep.mubr.f32.mxu0 0.0
      %2215 = vmatmul.mubr.f32.gmra.mxu0 %v2051
      %v2216 = vpop.f32.mrf.mxu0
      %v2217 = vadd.f32 0.0, %v2216
      %v2218 = vpop.f32.mrf.mxu0
      %2219 = vmatprep.mubr.f32.mxu0 0.0
      %2220 = vmatmul.mubr.f32.gmra.mxu0 %v2054
      %v2221 = vpop.f32.mrf.mxu0
      %v2222 = vadd.f32 0.0, %v2221
      %v2223 = vpop.f32.mrf.mxu0
      %2224 = vmatprep.mubr.f32.mxu0 0.0
      %2225 = vmatmul.mubr.f32.gmra.mxu0 %v2056
      %v2226 = vpop.f32.mrf.mxu0
      %v2227 = vadd.f32 0.0, %v2226
      %v2228 = vpop.f32.mrf.mxu0
      %2229 = vmatprep.mubr.f32.mxu0 0.0
      %2230 = vmatmul.mubr.f32.gmra.mxu0 %v2059
      %v2231 = vpop.f32.mrf.mxu0
      %v2232 = vadd.f32 0.0, %v2231
      %v2233 = vpop.f32.mrf.mxu0
      %2234 = vmatprep.mubr.f32.mxu0 0.0
      %2235 = vmatmul.mubr.f32.gmra.mxu0 %v2061
      %v2236 = vpop.f32.mrf.mxu0
      %v2237 = vadd.f32 0.0, %v2236
      %v2238 = vpop.f32.mrf.mxu0
      %2239 = vdwg.mxu0
      %v2240 = vadd.f32 %v2006, %v2162
      %v2241 = vadd.f32 %v2007, %v2167
      %v2242 = vadd.f32 %v2008, %v2172
      %v2243 = vadd.f32 %v2009, %v2177
      %v2244 = vadd.f32 %v2010, %v2182
      %v2245 = vadd.f32 %v2011, %v2187
      %v2246 = vadd.f32 %v2012, %v2192
      %v2247 = vadd.f32 %v2013, %v2197
      %v2248 = vadd.f32 %v2014, %v2202
      %v2249 = vadd.f32 %v2015, %v2207
      %v2250 = vadd.f32 %v2016, %v2212
      %v2251 = vadd.f32 %v2017, %v2217
      %v2252 = vadd.f32 %v2018, %v2222
      %v2253 = vadd.f32 %v2019, %v2227
      %v2254 = vadd.f32 %v2020, %v2232
      %v2255 = vadd.f32 %v2021, %v2237
      %v2256 = vld [vmem:[%s2] sm:$0x1]
      %v2258 = vlaneseq
      %v2259 = vshrl.u32 %v2258, 7
      %v2260 = vsub.s32 0, %v2259
      %v2261 = vrot.slane %v2256, %v2260
      %v2263 = vadd.f32 %v2240, %v2261
      %v2264 = vadd.f32 %v2241, %v2261
      %v2265 = vadd.f32 %v2242, %v2261
      %v2266 = vadd.f32 %v2243, %v2261
      %v2267 = vadd.f32 %v2244, %v2261
      %v2268 = vadd.f32 %v2245, %v2261
      %v2269 = vadd.f32 %v2246, %v2261
      %v2270 = vadd.f32 %v2247, %v2261
      %v2271 = vadd.f32 %v2248, %v2261
      %v2272 = vadd.f32 %v2249, %v2261
      %v2273 = vadd.f32 %v2250, %v2261
      %v2274 = vadd.f32 %v2251, %v2261
      %v2275 = vadd.f32 %v2252, %v2261
      %v2276 = vadd.f32 %v2253, %v2261
      %v2277 = vadd.f32 %v2254, %v2261
      %v2278 = vadd.f32 %v2255, %v2261
      %v2279 = vmax.f32 %v2263, 0.0
      %v2280 = vmax.f32 %v2264, 0.0
      %v2281 = vmax.f32 %v2265, 0.0
      %v2282 = vmax.f32 %v2266, 0.0
      %v2283 = vmax.f32 %v2267, 0.0
      %v2284 = vmax.f32 %v2268, 0.0
      %v2285 = vmax.f32 %v2269, 0.0
      %v2286 = vmax.f32 %v2270, 0.0
      %v2287 = vmax.f32 %v2271, 0.0
      %v2288 = vmax.f32 %v2272, 0.0
      %v2289 = vmax.f32 %v2273, 0.0
      %v2290 = vmax.f32 %v2274, 0.0
      %v2291 = vmax.f32 %v2275, 0.0
      %v2292 = vmax.f32 %v2276, 0.0
      %v2293 = vmax.f32 %v2277, 0.0
      %v2294 = vmax.f32 %v2278, 0.0
      %2295 = vst [vmem:[%s194] sm:$0xff] %v2279
      %2296 = vst [vmem:[%s194 + $0x8] sm:$0xff] %v2280
      %2297 = vst [vmem:[%s194 + $0x10] sm:$0xff] %v2281
      %2298 = vst [vmem:[%s194 + $0x18] sm:$0xff] %v2282
      %2299 = vst [vmem:[%s194 + $0x20] sm:$0xff] %v2283
      %2300 = vst [vmem:[%s194 + $0x28] sm:$0xff] %v2284
      %2301 = vst [vmem:[%s194 + $0x30] sm:$0xff] %v2285
      %2302 = vst [vmem:[%s194 + $0x38] sm:$0xff] %v2286
      %2303 = vst [vmem:[%s194 + $0x40] sm:$0xff] %v2287
      %2304 = vst [vmem:[%s194 + $0x48] sm:$0xff] %v2288
      %2305 = vst [vmem:[%s194 + $0x50] sm:$0xff] %v2289
      %2306 = vst [vmem:[%s194 + $0x58] sm:$0xff] %v2290
      %2307 = vst [vmem:[%s194 + $0x60] sm:$0xff] %v2291
      %2308 = vst [vmem:[%s194 + $0x68] sm:$0xff] %v2292
      %2309 = vst [vmem:[%s194 + $0x70] sm:$0xff] %v2293
      %2310 = vst [vmem:[%s194 + $0x78] sm:$0xff] %v2294
      %s2311 = smul.u32 8, %s19
      %p2312 = scmp.lt.s32.totalorder %s18, 1
      %s2313 = scalar_select %p2312, %s18, 1
      %p2314 = scmp.lt.s32.totalorder %s2311, 15
      %s2315 = scalar_select %p2314, %s2311, 15
      %s2316 = smul.addr %s2315, 2
      %s2317 = smul.addr %s2313, 32
      %s2318 = sadd.s32 %s2316, %s2317
      %s2319 = smul.addr %s2318, 8
      %s2320 = scalar_lea.vmem %s3, %s2319
      // Predicated region
      $region33: #{repvgg_block.1} parent=31 // pred_check
        %p2321 = pneg %p114
      $region34: #{repvgg_block.1} parent=31 // pred_check_branch
        %2323 = sbr.rel (%p2321) target = $region36
      $region35: #{repvgg_block.1} parent=31 // pred_region
        %s2324 = smul.u32 8, %s19
      $region36: #{repvgg_block.1} parent=31 // pred_fallthru
        _
    $region32: #{repvgg_block.1} parent=5 // pred_fallthru
      _
    %p2325 = scmp.le.s32.totalorder 2, %s9
    // Predicated region
    $region37: #{repvgg_block.1} parent=5 // pred_check
      %p2326 = pneg %p2325
    $region38: #{repvgg_block.1} parent=5 // pred_check_branch
      %2328 = sbr.rel (%p2326) target = $region40
    $region39: #{repvgg_block.1} parent=5 // pred_region
      %s2329 = ssub.s32 %s9, 2
      // Predicated region
      $region41: #{repvgg_block.1} parent=39 // pred_check
        %p2330 = pneg %p120
      $region42: #{repvgg_block.1} parent=39 // pred_check_branch
        %2332 = sbr.rel (%p2330) target = $region44
      $region43: #{repvgg_block.1} parent=39 // pred_region
        %s2333 = smul.u32 8, %s21
        %p2334 = scmp.lt.s32.totalorder %s20, 1
        %s2335 = scalar_select %p2334, %s20, 1
        %p2336 = scmp.lt.s32.totalorder %s2333, 15
        %s2337 = scalar_select %p2336, %s2333, 15
        %s2338 = smul.addr %s2337, 2
        %s2339 = smul.addr %s2335, 32
        %s2340 = sadd.s32 %s2338, %s2339
        %s2341 = smul.addr %s2340, 8
        %s2342 = scalar_lea.vmem %s3, %s2341
      $region44: #{repvgg_block.1} parent=39 // pred_fallthru
        _
    $region40: #{repvgg_block.1} parent=5 // pred_fallthru
      _
  $region6: #{repvgg_block.1} parent=0 // loop_footer
    %s13 = sadd.s32 1, %s9
  $region7: #{repvgg_block.1} parent=0 // loop_footer_branch
    %8 = sbr.rel target = $region3
  $region8: #{repvgg_block.1} parent=0 // loop_exit
    _

</llo_original>
